<compile_context>
chip_gen: v6e
topology: v6e:2x2x1
jax: 0.10.0
libtpu: 0.0.40
codegen_flags: <defaults>
</compile_context>

<pallas_src>
import functools

import jax
import jax.numpy as jnp
from jax.experimental import pallas as pl
from jax.experimental.pallas import tpu as pltpu

LANE = 128
MIB = 1024 * 1024


def _round_up(n, m):
    return (n + m - 1) // m * m


def _pad_last(x, target):
    pad = target - x.shape[-1]
    if pad <= 0:
        return x
    return jnp.pad(x, [(0, 0)] * (x.ndim - 1) + [(0, pad)])


def _pick_block_n(n):
    """Images per grid step: batch several per step, keep >= 2 grid steps when possible."""
    for b in (8, 4, 2):
        if n % b == 0 and n // b >= 2:
            return b
    return 1


# ---------------------------------------------------------------------------
# Kernel 1: fused conv3x3(pad=1) + bias + ReLU + global average pool
#   grid = (N // B_blk,)  -- B_blk images per step, "parallel" -> megacore sharding
#   conv weights resident (constant index_map); im2col built on-chip and consumed
#   by a single K=Kp(=128) MXU matmul (f32 accumulation).
# ---------------------------------------------------------------------------
def conv_relu_gap_kernel(xp_ref, w_ref, b_ref, o_ref, *, H, W, C, Kp):
    # xp_ref: [B, H+2, W+2, C]  bf16 padded images for this block
    # w_ref : [Kp, Fp]          bf16 packed conv taps (row (i*3+j)*C + c)
    # b_ref : [1, Fp]           f32 bias
    # o_ref : [1, B, Fp]        f32 pooled feature rows
    B = xp_ref.shape[0]
    Fp = o_ref.shape[-1]
    HW = H * W

    x = xp_ref[...]                                   # bf16, no f32 round-trip

    # On-chip im2col: 9 shifted taps concatenated on the lane axis (+ zero tail
    # to Kp) so the MXU sees one lane-dense [B*H*W, Kp] operand.
    pieces = []
    for i in range(3):                                # unrolled at trace time
        for j in range(3):
            pieces.append(x[:, i:i + H, j:j + W, :])  # [B, H, W, C] bf16
    tail = Kp - 9 * C
    if tail > 0:
        pieces.append(jnp.zeros((B, H, W, tail), jnp.bfloat16))
    col = jnp.concatenate(pieces, axis=-1)            # [B, H, W, Kp]
    col = col.reshape(B * HW, Kp)                     # leading-dims merge only

    # Single MXU matmul (internal f32 accumulation), then bias + ReLU.
    acc = jnp.dot(col, w_ref[...], preferred_element_type=jnp.float32)  # [B*HW, Fp]
    act = jnp.maximum(acc + b_ref[...], 0.0)

    # Fused global average pool per image (one reduction + scalar multiply each).
    inv = 1.0 / HW
    rows = [jnp.sum(act[b * HW:(b + 1) * HW, :], axis=0, keepdims=True) * inv
            for b in range(B)]
    o_ref[0] = jnp.concatenate(rows, axis=0) if B > 1 else rows[0]


def conv_relu_gap(xp_bf16, w_bf16, b_f32, *, H, W):
    N, Hp, Wp, C = xp_bf16.shape
    Kp, Fp = w_bf16.shape
    Bn = _pick_block_n(N)
    num_blocks = N // Bn

    # VMEM budget from actual block sizes (conservative, lane/sublane padded),
    # clamped well below v7x's 64 MiB physical per-core VMEM.
    in_block = Bn * Hp * _round_up(Wp, 8) * _round_up(C, LANE) * 2   # bf16 input tile
    slab = Bn * H * W * Kp * 2                                       # im2col (bf16)
    actb = Bn * H * W * Fp * 4                                       # f32 activations
    wgt = Kp * Fp * 2 + Fp * 4                                       # weights + bias
    outb = Bn * Fp * 4
    est = 2 * in_block + slab + actb + 2 * wgt + 2 * outb
    vmem_limit = int(min(max(4 * est + 4 * MIB, 32 * MIB), 48 * MIB))

    kernel = functools.partial(conv_relu_gap_kernel, H=H, W=W, C=C, Kp=Kp)
    out = pl.pallas_call(
        kernel,
        out_shape=jax.ShapeDtypeStruct((num_blocks, Bn, Fp), jnp.float32),
        grid=(num_blocks,),
        in_specs=[
            pl.BlockSpec((Bn, Hp, Wp, C), lambda n: (n, 0, 0, 0)),
            # Resident weights/bias (constant index_map -> no re-DMA across steps).
            # TODO(synk): add pipeline_mode=pl.Buffered(1) once weight tiles grow;
            #             negligible (one extra 32 KiB buffer) at this size.
            pl.BlockSpec((Kp, Fp), lambda n: (0, 0)),
            pl.BlockSpec((1, Fp), lambda n: (0, 0)),
        ],
        out_specs=pl.BlockSpec((1, Bn, Fp), lambda n: (n, 0, 0)),
        compiler_params=pltpu.CompilerParams(
            dimension_semantics=("parallel",),      # shard image blocks across cores
            vmem_limit_bytes=vmem_limit,
        ),
    )(xp_bf16, w_bf16, b_f32)
    return out.reshape(N, Fp)


# ---------------------------------------------------------------------------
# Kernel 2: fused GCNConv + final Linear (lane-padded to 128; bf16 MXU operands,
# f32 accumulation; negligible cost at this size, kept in Pallas for completeness).
#   h   = A_norm @ (X @ W_gcn) + b_gcn
#   out = h @ W_fc + b_fc
# ---------------------------------------------------------------------------
def gcn_fc_kernel(a_ref, x_ref, wg_ref, bg_ref, wf_ref, bf_ref, o_ref):
    xw = jnp.dot(x_ref[...], wg_ref[...], preferred_element_type=jnp.float32)   # [N, Gp]
    h = jnp.dot(a_ref[...], xw, preferred_element_type=jnp.float32) + bg_ref[...]
    o_ref[...] = jnp.dot(h.astype(jnp.bfloat16), wf_ref[...],
                         preferred_element_type=jnp.float32) + bf_ref[...]


def gcn_fc(a_norm, x_bf16, w_gcn, b_gcn, w_fc, b_fc):
    N, Fp = x_bf16.shape
    Gp = w_gcn.shape[1]
    Cp = w_fc.shape[1]
    return pl.pallas_call(
        gcn_fc_kernel,
        out_shape=jax.ShapeDtypeStruct((N, Cp), jnp.float32),
        grid=(1,),
        in_specs=[
            pl.BlockSpec((N, N), lambda i: (0, 0)),
            pl.BlockSpec((N, Fp), lambda i: (0, 0)),
            pl.BlockSpec((Fp, Gp), lambda i: (0, 0)),
            pl.BlockSpec((1, Gp), lambda i: (0, 0)),
            pl.BlockSpec((Gp, Cp), lambda i: (0, 0)),
            pl.BlockSpec((1, Cp), lambda i: (0, 0)),
        ],
        out_specs=pl.BlockSpec((N, Cp), lambda i: (0, 0)),
        compiler_params=pltpu.CompilerParams(
            dimension_semantics=("arbitrary",),
            vmem_limit_bytes=32 * MIB,
        ),
    )(a_norm, x_bf16, w_gcn, b_gcn, w_fc, b_fc)


# ---------------------------------------------------------------------------
# Glue: GCN adjacency normalization, parameter init, full forward
# ---------------------------------------------------------------------------
def gcn_normalize(edge_index, num_nodes):
    """Symmetric GCN normalization with self loops (PyG default).
    Scatter-ADD so duplicate edges accumulate, matching PyG's gcn_norm."""
    A = jnp.zeros((num_nodes, num_nodes), jnp.float32)
    A = A.at[edge_index[0], edge_index[1]].add(1.0)
    A = A + jnp.eye(num_nodes, dtype=jnp.float32)
    deg = A.sum(axis=1)
    dinv = jax.lax.rsqrt(deg)
    return dinv[:, None] * A * dinv[None, :]


def init_params(key, in_chans, num_features, gnn_out_channels, num_classes):
    k = jax.random.split(key, 6)
    # NOTE: conv weight layout is (3, 3, C_in, F). To load real PyTorch weights
    # (F, C_in, 3, 3) use w.permute(2, 3, 1, 0) -- do NOT reshape directly.
    return {
        "conv_w": jax.random.normal(k[0], (3, 3, in_chans, num_features), jnp.float32) * 0.1,
        "conv_b": jax.random.normal(k[1], (num_features,), jnp.float32) * 0.01,
        "gcn_w": jax.random.normal(k[2], (num_features, gnn_out_channels), jnp.float32) * 0.1,
        "gcn_b": jax.random.normal(k[3], (gnn_out_channels,), jnp.float32) * 0.01,
        "fc_w": jax.random.normal(k[4], (gnn_out_channels, num_classes), jnp.float32) * 0.1,
        "fc_b": jax.random.normal(k[5], (num_classes,), jnp.float32) * 0.01,
    }


def base_model_forward(params, images_nchw, edge_index):
    N, C, H, W = images_nchw.shape
    F = params["conv_w"].shape[-1]
    G = params["gcn_w"].shape[-1]
    NC = params["fc_w"].shape[-1]
    Fp = _round_up(F, LANE)
    Gp = _round_up(G, LANE)
    Cp = _round_up(NC, LANE)
    Kp = _round_up(9 * C, LANE)          # im2col contraction depth, padded to 128

    # NCHW -> NHWC, pad=1 halo for the 3x3 conv, bf16 (half the HBM read).
    x = jnp.transpose(images_nchw, (0, 2, 3, 1))
    xp = jnp.pad(x, ((0, 0), (1, 1), (1, 1), (0, 0))).astype(jnp.bfloat16)

    # Conv params packed for one K=Kp matmul: row (i*3+j)*C + c <- conv_w[i, j, c, :].
    w_conv = params["conv_w"].reshape(9 * C, F)
    w_conv = _pad_last(jnp.pad(w_conv, ((0, Kp - 9 * C), (0, 0))), Fp).astype(jnp.bfloat16)
    b_conv = _pad_last(params["conv_b"], Fp).reshape(1, Fp).astype(jnp.float32)

    # --- CNN stem: fused conv3x3 + ReLU + GAP, one Pallas kernel, no HBM intermediates ---
    feat = conv_relu_gap(xp, w_conv, b_conv, H=H, W=W)     # [N, Fp] f32 (cols >= F are 0)

    # --- GCNConv + fc, fused Pallas kernel (zero-padded to 128 lanes; bf16 MXU feeds) ---
    a_norm = gcn_normalize(edge_index, N)
    wg = _pad_last(jnp.pad(params["gcn_w"], ((0, Fp - F), (0, 0))), Gp).astype(jnp.bfloat16)
    bg = _pad_last(params["gcn_b"], Gp).reshape(1, Gp).astype(jnp.float32)
    wf = _pad_last(jnp.pad(params["fc_w"], ((0, Gp - G), (0, 0))), Cp).astype(jnp.bfloat16)
    bf = _pad_last(params["fc_b"], Cp).reshape(1, Cp).astype(jnp.float32)

    out_padded = gcn_fc(a_norm, feat.astype(jnp.bfloat16), wg, bg, wf, bf)  # [N, Cp]
    return out_padded[:, :NC]                                               # [N, num_classes]


if __name__ == "__main__":
    batch = 2            # images are graph nodes (one feature vector per image)
    in_chans = 4
    H = W = 16
    num_features = 32    # backbone feature dim
    gnn_out_channels = 16
    num_classes = 10

    key = jax.random.PRNGKey(0)
    k_img, k_par = jax.random.split(key)

    images = jax.random.normal(k_img, (batch, in_chans, H, W), jnp.float32)
    edge_index = jnp.array([[0, 1], [1, 0]], dtype=jnp.int32)   # bidirectional edge

    params = init_params(k_par, in_chans, num_features, gnn_out_channels, num_classes)

    fwd = jax.jit(base_model_forward)
    out = fwd(params, images, edge_index)
    jax.block_until_ready(out)
    assert out.shape == (batch, num_classes)
    print("KERNEL_OK")
</pallas_src>

<mosaic_0001>
module attributes {stable_mosaic.version = 11 : i64} {
  func.func @conv_relu_gap_kernel(%arg0: i32, %arg1: memref<1x18x18x4xbf16, #tpu.memory_space<vmem>>, %arg2: memref<128x128xbf16, #tpu.memory_space<vmem>>, %arg3: memref<1x128xf32, #tpu.memory_space<vmem>>, %arg4: memref<1x1x128xf32, #tpu.memory_space<vmem>>) attributes {dimension_semantics = [#tpu.dimension_semantics<parallel>], iteration_bounds = array<i64: 2>, scalar_prefetch = 0 : i64, scratch_operands = 0 : i64, tpu.core_type = #tpu.core_type<tc>, window_params = [{transform_indices = @transform_0, window_bounds = array<i64: 1, 18, 18, 4>}, {pipeline_mode = #tpu.pipeline_mode<synchronous>, transform_indices = @transform_1, window_bounds = array<i64: 128, 128>}, {pipeline_mode = #tpu.pipeline_mode<synchronous>, transform_indices = @transform_2, window_bounds = array<i64: 1, 128>}, {transform_indices = @transform_3, window_bounds = array<i64: 1, 1, 128>}]} {
    %c0 = arith.constant 0 : index
    %c0_0 = arith.constant 0 : index
    %c0_1 = arith.constant 0 : index
    %c0_2 = arith.constant 0 : index
    %0 = vector.load %arg1[%c0, %c0_0, %c0_1, %c0_2] : memref<1x18x18x4xbf16, #tpu.memory_space<vmem>>, vector<1x18x18x4xbf16>
    %1 = vector.extract_strided_slice %0 {offsets = [0, 0, 0, 0], sizes = [1, 16, 16, 4], strides = [1, 1, 1, 1]} : vector<1x18x18x4xbf16> to vector<1x16x16x4xbf16>
    %2 = vector.extract_strided_slice %0 {offsets = [0, 0, 1, 0], sizes = [1, 16, 16, 4], strides = [1, 1, 1, 1]} : vector<1x18x18x4xbf16> to vector<1x16x16x4xbf16>
    %3 = vector.extract_strided_slice %0 {offsets = [0, 0, 2, 0], sizes = [1, 16, 16, 4], strides = [1, 1, 1, 1]} : vector<1x18x18x4xbf16> to vector<1x16x16x4xbf16>
    %4 = vector.extract_strided_slice %0 {offsets = [0, 1, 0, 0], sizes = [1, 16, 16, 4], strides = [1, 1, 1, 1]} : vector<1x18x18x4xbf16> to vector<1x16x16x4xbf16>
    %5 = vector.extract_strided_slice %0 {offsets = [0, 1, 1, 0], sizes = [1, 16, 16, 4], strides = [1, 1, 1, 1]} : vector<1x18x18x4xbf16> to vector<1x16x16x4xbf16>
    %6 = vector.extract_strided_slice %0 {offsets = [0, 1, 2, 0], sizes = [1, 16, 16, 4], strides = [1, 1, 1, 1]} : vector<1x18x18x4xbf16> to vector<1x16x16x4xbf16>
    %7 = vector.extract_strided_slice %0 {offsets = [0, 2, 0, 0], sizes = [1, 16, 16, 4], strides = [1, 1, 1, 1]} : vector<1x18x18x4xbf16> to vector<1x16x16x4xbf16>
    %8 = vector.extract_strided_slice %0 {offsets = [0, 2, 1, 0], sizes = [1, 16, 16, 4], strides = [1, 1, 1, 1]} : vector<1x18x18x4xbf16> to vector<1x16x16x4xbf16>
    %9 = vector.extract_strided_slice %0 {offsets = [0, 2, 2, 0], sizes = [1, 16, 16, 4], strides = [1, 1, 1, 1]} : vector<1x18x18x4xbf16> to vector<1x16x16x4xbf16>
    %cst = arith.constant 0.000000e+00 : bf16
    %10 = vector.broadcast %cst : bf16 to vector<1x16x16x92xbf16>
    %11 = tpu.concatenate %1, %2, %3, %4, %5, %6, %7, %8, %9, %10 in 3 : vector<1x16x16x4xbf16>, vector<1x16x16x4xbf16>, vector<1x16x16x4xbf16>, vector<1x16x16x4xbf16>, vector<1x16x16x4xbf16>, vector<1x16x16x4xbf16>, vector<1x16x16x4xbf16>, vector<1x16x16x4xbf16>, vector<1x16x16x4xbf16>, vector<1x16x16x92xbf16> -> vector<1x16x16x128xbf16>
    %12 = vector.shape_cast %11 : vector<1x16x16x128xbf16> to vector<256x128xbf16>
    %c0_3 = arith.constant 0 : index
    %c0_4 = arith.constant 0 : index
    %13 = vector.load %arg2[%c0_3, %c0_4] : memref<128x128xbf16, #tpu.memory_space<vmem>>, vector<128x128xbf16>
    %cst_5 = arith.constant dense<0.000000e+00> : vector<256x128xf32>
    %14 = tpu.matmul %12, %13, %cst_5 {dimension_numbers = #tpu.dot_dimension_numbers<[1], [0], [0], [1], [0, 0, 1, 1], [], []>} : vector<256x128xbf16>, vector<128x128xbf16>, vector<256x128xf32> -> vector<256x128xf32>
    %c0_6 = arith.constant 0 : index
    %c0_7 = arith.constant 0 : index
    %15 = vector.load %arg3[%c0_6, %c0_7] : memref<1x128xf32, #tpu.memory_space<vmem>>, vector<1x128xf32>
    %16 = vector.broadcast %15 : vector<1x128xf32> to vector<256x128xf32>
    %17 = arith.addf %14, %16 : vector<256x128xf32>
    %cst_8 = arith.constant 0.000000e+00 : f32
    %18 = vector.broadcast %cst_8 : f32 to vector<256x128xf32>
    %19 = arith.maximumf %17, %18 : vector<256x128xf32>
    %cst_9 = arith.constant dense<0.000000e+00> : vector<128xf32>
    %20 = vector.multi_reduction <add>, %19, %cst_9 [0] : vector<256x128xf32> to vector<128xf32>
    %21 = vector.shape_cast %20 : vector<128xf32> to vector<1x128xf32>
    %cst_10 = arith.constant 3.906250e-03 : f32
    %22 = vector.broadcast %cst_10 : f32 to vector<1x128xf32>
    %23 = arith.mulf %21, %22 : vector<1x128xf32>
    %c0_11 = arith.constant 0 : index
    %c0_12 = arith.constant 0 : index
    %c0_13 = arith.constant 0 : index
    %24 = vector.load %arg4[%c0_11, %c0_12, %c0_13] : memref<1x1x128xf32, #tpu.memory_space<vmem>>, vector<1x1x128xf32>
    %25 = vector.shape_cast %24 : vector<1x1x128xf32> to vector<1x128xf32>
    %26 = vector.shape_cast %23 : vector<1x128xf32> to vector<1x1x128xf32>
    tpu.vector_store %arg4[%c0_11, %c0_12, %c0_13], %26 {strides = array<i32>} : memref<1x1x128xf32, #tpu.memory_space<vmem>>, vector<1x1x128xf32>,
    return
  }
  func.func @transform_0(%arg0: i32) -> (i32, i32, i32, i32) {
    %c0_i32 = arith.constant 0 : i32
    %c0_i32_0 = arith.constant 0 : i32
    %c0_i32_1 = arith.constant 0 : i32
    %c0_i32_2 = arith.constant 0 : i32
    return %arg0, %c0_i32, %c0_i32_0, %c0_i32_1 : i32, i32, i32, i32
  }
  func.func @transform_1(%arg0: i32) -> (i32, i32) {
    %c0_i32 = arith.constant 0 : i32
    %c0_i32_0 = arith.constant 0 : i32
    %c0_i32_1 = arith.constant 0 : i32
    return %c0_i32, %c0_i32_0 : i32, i32
  }
  func.func @transform_2(%arg0: i32) -> (i32, i32) {
    %c0_i32 = arith.constant 0 : i32
    %c0_i32_0 = arith.constant 0 : i32
    %c0_i32_1 = arith.constant 0 : i32
    return %c0_i32, %c0_i32_0 : i32, i32
  }
  func.func @transform_3(%arg0: i32) -> (i32, i32, i32) {
    %c0_i32 = arith.constant 0 : i32
    %c0_i32_0 = arith.constant 0 : i32
    %c0_i32_1 = arith.constant 0 : i32
    return %arg0, %c0_i32, %c0_i32_0 : i32, i32, i32
  }
}

module attributes {stable_mosaic.version = 11 : i64} {
  func.func @gcn_fc_kernel(%arg0: i32, %arg1: memref<2x2xf32, #tpu.memory_space<vmem>>, %arg2: memref<2x128xbf16, #tpu.memory_space<vmem>>, %arg3: memref<128x128xbf16, #tpu.memory_space<vmem>>, %arg4: memref<1x128xf32, #tpu.memory_space<vmem>>, %arg5: memref<128x128xbf16, #tpu.memory_space<vmem>>, %arg6: memref<1x128xf32, #tpu.memory_space<vmem>>, %arg7: memref<2x128xf32, #tpu.memory_space<vmem>>) attributes {dimension_semantics = [#tpu.dimension_semantics<arbitrary>], iteration_bounds = array<i64: 1>, scalar_prefetch = 0 : i64, scratch_operands = 0 : i64, tpu.core_type = #tpu.core_type<tc>, window_params = [{pipeline_mode = #tpu.pipeline_mode<synchronous>, transform_indices = @transform_0, window_bounds = array<i64: 2, 2>}, {pipeline_mode = #tpu.pipeline_mode<synchronous>, transform_indices = @transform_1, window_bounds = array<i64: 2, 128>}, {pipeline_mode = #tpu.pipeline_mode<synchronous>, transform_indices = @transform_2, window_bounds = array<i64: 128, 128>}, {pipeline_mode = #tpu.pipeline_mode<synchronous>, transform_indices = @transform_3, window_bounds = array<i64: 1, 128>}, {pipeline_mode = #tpu.pipeline_mode<synchronous>, transform_indices = @transform_4, window_bounds = array<i64: 128, 128>}, {pipeline_mode = #tpu.pipeline_mode<synchronous>, transform_indices = @transform_5, window_bounds = array<i64: 1, 128>}, {pipeline_mode = #tpu.pipeline_mode<synchronous>, transform_indices = @transform_6, window_bounds = array<i64: 2, 128>}]} {
    %c0 = arith.constant 0 : index
    %c0_0 = arith.constant 0 : index
    %0 = vector.load %arg2[%c0, %c0_0] : memref<2x128xbf16, #tpu.memory_space<vmem>>, vector<2x128xbf16>
    %c0_1 = arith.constant 0 : index
    %c0_2 = arith.constant 0 : index
    %1 = vector.load %arg3[%c0_1, %c0_2] : memref<128x128xbf16, #tpu.memory_space<vmem>>, vector<128x128xbf16>
    %cst = arith.constant dense<0.000000e+00> : vector<2x128xf32>
    %2 = tpu.matmul %0, %1, %cst {dimension_numbers = #tpu.dot_dimension_numbers<[1], [0], [0], [1], [0, 0, 1, 1], [], []>} : vector<2x128xbf16>, vector<128x128xbf16>, vector<2x128xf32> -> vector<2x128xf32>
    %c0_3 = arith.constant 0 : index
    %c0_4 = arith.constant 0 : index
    %3 = vector.load %arg1[%c0_3, %c0_4] : memref<2x2xf32, #tpu.memory_space<vmem>>, vector<2x2xf32>
    %cst_5 = arith.constant dense<0.000000e+00> : vector<2x128xf32>
    %4 = tpu.matmul %3, %2, %cst_5 {dimension_numbers = #tpu.dot_dimension_numbers<[1], [0], [0], [1], [0, 0, 1, 1], [], []>} : vector<2x2xf32>, vector<2x128xf32>, vector<2x128xf32> -> vector<2x128xf32>
    %c0_6 = arith.constant 0 : index
    %c0_7 = arith.constant 0 : index
    %5 = vector.load %arg4[%c0_6, %c0_7] : memref<1x128xf32, #tpu.memory_space<vmem>>, vector<1x128xf32>
    %6 = vector.broadcast %5 : vector<1x128xf32> to vector<2x128xf32>
    %7 = arith.addf %4, %6 : vector<2x128xf32>
    %8 = arith.truncf %7 : vector<2x128xf32> to vector<2x128xbf16>
    %c0_8 = arith.constant 0 : index
    %c0_9 = arith.constant 0 : index
    %9 = vector.load %arg5[%c0_8, %c0_9] : memref<128x128xbf16, #tpu.memory_space<vmem>>, vector<128x128xbf16>
    %cst_10 = arith.constant dense<0.000000e+00> : vector<2x128xf32>
    %10 = tpu.matmul %8, %9, %cst_10 {dimension_numbers = #tpu.dot_dimension_numbers<[1], [0], [0], [1], [0, 0, 1, 1], [], []>} : vector<2x128xbf16>, vector<128x128xbf16>, vector<2x128xf32> -> vector<2x128xf32>
    %c0_11 = arith.constant 0 : index
    %c0_12 = arith.constant 0 : index
    %11 = vector.load %arg6[%c0_11, %c0_12] : memref<1x128xf32, #tpu.memory_space<vmem>>, vector<1x128xf32>
    %12 = vector.broadcast %11 : vector<1x128xf32> to vector<2x128xf32>
    %13 = arith.addf %10, %12 : vector<2x128xf32>
    %c0_13 = arith.constant 0 : index
    %c0_14 = arith.constant 0 : index
    %14 = vector.load %arg7[%c0_13, %c0_14] : memref<2x128xf32, #tpu.memory_space<vmem>>, vector<2x128xf32>
    tpu.vector_store %arg7[%c0_13, %c0_14], %13 {strides = array<i32>} : memref<2x128xf32, #tpu.memory_space<vmem>>, vector<2x128xf32>,
    return
  }
  func.func @transform_0(%arg0: i32) -> (i32, i32) {
    %c0_i32 = arith.constant 0 : i32
    %c0_i32_0 = arith.constant 0 : i32
    %c0_i32_1 = arith.constant 0 : i32
    return %c0_i32, %c0_i32_0 : i32, i32
  }
  func.func @transform_1(%arg0: i32) -> (i32, i32) {
    %c0_i32 = arith.constant 0 : i32
    %c0_i32_0 = arith.constant 0 : i32
    %c0_i32_1 = arith.constant 0 : i32
    return %c0_i32, %c0_i32_0 : i32, i32
  }
  func.func @transform_2(%arg0: i32) -> (i32, i32) {
    %c0_i32 = arith.constant 0 : i32
    %c0_i32_0 = arith.constant 0 : i32
    %c0_i32_1 = arith.constant 0 : i32
    return %c0_i32, %c0_i32_0 : i32, i32
  }
  func.func @transform_3(%arg0: i32) -> (i32, i32) {
    %c0_i32 = arith.constant 0 : i32
    %c0_i32_0 = arith.constant 0 : i32
    %c0_i32_1 = arith.constant 0 : i32
    return %c0_i32, %c0_i32_0 : i32, i32
  }
  func.func @transform_4(%arg0: i32) -> (i32, i32) {
    %c0_i32 = arith.constant 0 : i32
    %c0_i32_0 = arith.constant 0 : i32
    %c0_i32_1 = arith.constant 0 : i32
    return %c0_i32, %c0_i32_0 : i32, i32
  }
  func.func @transform_5(%arg0: i32) -> (i32, i32) {
    %c0_i32 = arith.constant 0 : i32
    %c0_i32_0 = arith.constant 0 : i32
    %c0_i32_1 = arith.constant 0 : i32
    return %c0_i32, %c0_i32_0 : i32, i32
  }
  func.func @transform_6(%arg0: i32) -> (i32, i32) {
    %c0_i32 = arith.constant 0 : i32
    %c0_i32_0 = arith.constant 0 : i32
    %c0_i32_1 = arith.constant 0 : i32
    return %c0_i32, %c0_i32_0 : i32, i32
  }
}

</mosaic_0001>

<llo_original>
// kernel: base_model_forward.3
$region0: #{base_model_forward.3}
  #allocation0 [shape = 'u32[]', space=smem, size = 0x4, offset = 0x4, fixed_abs, tag = 'smem constant byte address 0x4 - core index']
  #allocation1 [shape = 'u32[144,128]{1,0:T(1,128)}', space=vmem, size = 0x12000, scoped, tag = 'internal scratch']
  %s0 = inlined_call_operand.vmem [shape: f32[2,2], index: 0, kind: input, shape index: {}]
  %s1 = inlined_call_operand.vmem [shape: bf16[2,128], index: 1, kind: input, shape index: {}]
  %s2 = inlined_call_operand.vmem [shape: bf16[128,128], index: 2, kind: input, shape index: {}]
  %s3 = inlined_call_operand.vmem [shape: f32[1,128], index: 3, kind: input, shape index: {}]
  %s4 = inlined_call_operand.vmem [shape: bf16[128,128], index: 4, kind: input, shape index: {}]
  %s5 = inlined_call_operand.vmem [shape: f32[1,128], index: 5, kind: input, shape index: {}]
  %s6 = inlined_call_operand.hbm [shape: f32[2,128], index: 6, kind: output, shape index: {}]
  %s7 = sld [smem:[#allocation0]]
  $region34: #{base_model_forward.3} parent=0
    _
  %s9 = ssub.s32 1, %s7
  %s10 = scalar_select 0, %s9, %s7
  $region1: #{base_model_forward.3} parent=0
    #allocation2 [shape = 'u8[1024]{0}', space=vmem, size = 0x400, scoped, tag = 'output window, operand 0, single buffered']
    #allocation3 [shape = 's32[1]{0}', space=sflag, size = 0x4, scoped, tag = 'scoped memory for base_model_forward.3']
    %11 = vsyncpa [#allocation3], 0
    // Predicated region
    $region2: #{base_model_forward.3} parent=1 // pred_check
      _
    $region3: #{base_model_forward.3} parent=1 // pred_check_branch
      %13 = sbr.rel (0) target = $region5
    $region4: #{base_model_forward.3} parent=1 // pred_region
      _
    $region5: #{base_model_forward.3} parent=1 // pred_fallthru
      _
    // Predicated region
    $region6: #{base_model_forward.3} parent=1 // pred_check
      _
    $region7: #{base_model_forward.3} parent=1 // pred_check_branch
      %15 = sbr.rel (0) target = $region9
    $region8: #{base_model_forward.3} parent=1 // pred_region
      _
    $region9: #{base_model_forward.3} parent=1 // pred_fallthru
      _
    // Predicated region
    $region10: #{base_model_forward.3} parent=1 // pred_check
      _
    $region11: #{base_model_forward.3} parent=1 // pred_check_branch
      %17 = sbr.rel (0) target = $region13
    $region12: #{base_model_forward.3} parent=1 // pred_region
      _
    $region13: #{base_model_forward.3} parent=1 // pred_fallthru
      _
    // Predicated region
    $region14: #{base_model_forward.3} parent=1 // pred_check
      _
    $region15: #{base_model_forward.3} parent=1 // pred_check_branch
      %19 = sbr.rel (0) target = $region17
    $region16: #{base_model_forward.3} parent=1 // pred_region
      _
    $region17: #{base_model_forward.3} parent=1 // pred_fallthru
      _
    // Predicated region
    $region18: #{base_model_forward.3} parent=1 // pred_check
      _
    $region19: #{base_model_forward.3} parent=1 // pred_check_branch
      %21 = sbr.rel (0) target = $region21
    $region20: #{base_model_forward.3} parent=1 // pred_region
      _
    $region21: #{base_model_forward.3} parent=1 // pred_fallthru
      _
    // Predicated region
    $region22: #{base_model_forward.3} parent=1 // pred_check
      _
    $region23: #{base_model_forward.3} parent=1 // pred_check_branch
      %23 = sbr.rel (0) target = $region25
    $region24: #{base_model_forward.3} parent=1 // pred_region
      _
    $region25: #{base_model_forward.3} parent=1 // pred_fallthru
      _
    %v25 = vld [vmem:[%s1] sm:$0x1]
    %v26 = vld [vmem:[%s2] sm:$0xf]
    %v27 = vld [vmem:[%s2 + $0x4] sm:$0xf]
    %v28 = vld [vmem:[%s2 + $0x8] sm:$0xf]
    %v29 = vld [vmem:[%s2 + $0xc] sm:$0xf]
    %v30 = vld [vmem:[%s2 + $0x10] sm:$0xf]
    %v31 = vld [vmem:[%s2 + $0x14] sm:$0xf]
    %v32 = vld [vmem:[%s2 + $0x18] sm:$0xf]
    %v33 = vld [vmem:[%s2 + $0x1c] sm:$0xf]
    %v34 = vld [vmem:[%s2 + $0x20] sm:$0xf]
    %v35 = vld [vmem:[%s2 + $0x24] sm:$0xf]
    %v36 = vld [vmem:[%s2 + $0x28] sm:$0xf]
    %v37 = vld [vmem:[%s2 + $0x2c] sm:$0xf]
    %v38 = vld [vmem:[%s2 + $0x30] sm:$0xf]
    %v39 = vld [vmem:[%s2 + $0x34] sm:$0xf]
    %v40 = vld [vmem:[%s2 + $0x38] sm:$0xf]
    %v41 = vld [vmem:[%s2 + $0x3c] sm:$0xf]
    %v58 = vunpack.c.l.b16 %v26
    %v59 = vunpack.c.l.b16 %v27
    %v60 = vunpack.c.l.b16 %v28
    %v61 = vunpack.c.l.b16 %v29
    %v62 = vunpack.c.l.b16 %v30
    %v63 = vunpack.c.l.b16 %v31
    %v64 = vunpack.c.l.b16 %v32
    %v65 = vunpack.c.l.b16 %v33
    %v66 = vunpack.c.l.b16 %v34
    %v67 = vunpack.c.l.b16 %v35
    %v68 = vunpack.c.l.b16 %v36
    %v69 = vunpack.c.l.b16 %v37
    %v70 = vunpack.c.l.b16 %v38
    %v71 = vunpack.c.l.b16 %v39
    %v72 = vunpack.c.l.b16 %v40
    %v73 = vunpack.c.l.b16 %v41
    %v74 = vpack.c.b16 %v59, %v58
    %v75 = vpack.c.b16 %v61, %v60
    %v76 = vpack.c.b16 %v63, %v62
    %v77 = vpack.c.b16 %v65, %v64
    %v78 = vpack.c.b16 %v67, %v66
    %v79 = vpack.c.b16 %v69, %v68
    %v80 = vpack.c.b16 %v71, %v70
    %v81 = vpack.c.b16 %v73, %v72
    %90 = vmatprep.subr.bf16.mxu0 0
    %91 = vmatpush1.bf16.msra.mxu0 %v81
    %92 = vmatprep.subr.bf16.mxu0 0
    %93 = vmatpush1.bf16.msra.mxu0 %v80
    %94 = vmatprep.subr.bf16.mxu0 0
    %95 = vmatpush1.bf16.msra.mxu0 %v79
    %96 = vmatprep.subr.bf16.mxu0 0
    %97 = vmatpush1.bf16.msra.mxu0 %v78
    %98 = vmatprep.subr.bf16.mxu0 0
    %99 = vmatpush1.bf16.msra.mxu0 %v77
    %100 = vmatprep.subr.bf16.mxu0 0
    %101 = vmatpush1.bf16.msra.mxu0 %v76
    %102 = vmatprep.subr.bf16.mxu0 0
    %103 = vmatpush1.bf16.msra.mxu0 %v75
    %104 = vmatprep.subr.bf16.mxu0 0
    %105 = vmatpush1.bf16.msra.mxu0 %v74
    %106 = vmatprep.subr.bf16.mxu0 0
    %107 = vmatpush2.bf16.msra.mxu0 0
    %108 = vmatprep.subr.bf16.mxu0 0
    %109 = vmatpush2.bf16.msra.mxu0 0
    %110 = vmatprep.subr.bf16.mxu0 0
    %111 = vmatpush2.bf16.msra.mxu0 0
    %112 = vmatprep.subr.bf16.mxu0 0
    %113 = vmatpush2.bf16.msra.mxu0 0
    %114 = vmatprep.subr.bf16.mxu0 0
    %115 = vmatpush2.bf16.msra.mxu0 0
    %116 = vmatprep.subr.bf16.mxu0 0
    %117 = vmatpush2.bf16.msra.mxu0 0
    %118 = vmatprep.subr.bf16.mxu0 0
    %119 = vmatpush2.bf16.msra.mxu0 0
    %120 = vmatprep.subr.bf16.mxu0 0
    %121 = vmatpush2.bf16.msra.mxu0 0
    %122 = vmatprep.mubr.bf16.mxu0 0
    %123 = vmatmul.mubr.bf16.gmra.mxu0 %v25
    %v124 = vpop.f32.mrf.mxu0
    %v125 = vadd.f32 0.0, %v124
    %v126 = vpop.f32.mrf.mxu0
    %v127 = vpop.f32.mrf.mxu0
    %v128 = vpop.f32.mrf.mxu0
    %129 = vdwg.mxu0
    %v130 = vld [vmem:[%s0] sm:$0x3]
    %v131 = vld [vmem:[%s3] sm:$0x1]
    %v133 = vlaneseq
    %v134 = vshrl.u32 %v133, 7
    %v135 = vsub.s32 0, %v134
    %v136 = vrot.slane %v131, %v135
    %vm138 = vcmask 15360
    %v140 = vsel %vm138, %v130, 0
    %vm142 = vcmask 1041408
    %v144 = vsel %vm142, %v125, 0
    %146 = vmatprep.subr.mxu0 0.0
    %147 = vmatpush1.msra.mxu0 0.0
    %148 = vmatprep.subr.mxu0 0.0
    %149 = vmatpush1.msra.mxu0 0.0
    %150 = vmatprep.subr.mxu0 0.0
    %151 = vmatpush1.msra.mxu0 0.0
    %152 = vmatprep.subr.mxu0 0.0
    %153 = vmatpush1.msra.mxu0 0.0
    %154 = vmatprep.subr.mxu0 0.0
    %155 = vmatpush1.msra.mxu0 0.0
    %156 = vmatprep.subr.mxu0 0.0
    %157 = vmatpush1.msra.mxu0 0.0
    %158 = vmatprep.subr.mxu0 0.0
    %159 = vmatpush1.msra.mxu0 0.0
    %160 = vmatprep.subr.mxu0 0.0
    %161 = vmatpush1.msra.mxu0 0.0
    %162 = vmatprep.subr.mxu0 0.0
    %163 = vmatpush1.msra.mxu0 0.0
    %164 = vmatprep.subr.mxu0 0.0
    %165 = vmatpush1.msra.mxu0 0.0
    %166 = vmatprep.subr.mxu0 0.0
    %167 = vmatpush1.msra.mxu0 0.0
    %168 = vmatprep.subr.mxu0 0.0
    %169 = vmatpush1.msra.mxu0 0.0
    %170 = vmatprep.subr.mxu0 0.0
    %171 = vmatpush1.msra.mxu0 0.0
    %172 = vmatprep.subr.mxu0 0.0
    %173 = vmatpush1.msra.mxu0 0.0
    %174 = vmatprep.subr.mxu0 0.0
    %175 = vmatpush1.msra.mxu0 0.0
    %176 = vmatprep.subr.mxu0 0.0
    %177 = vmatpush1.msra.mxu0 %v144
    %178 = vmatprep.subr.mxu0 0.0
    %179 = vmatpush2.msra.mxu0 0.0
    %180 = vmatprep.subr.mxu0 0.0
    %181 = vmatpush2.msra.mxu0 0.0
    %182 = vmatprep.subr.mxu0 0.0
    %183 = vmatpush2.msra.mxu0 0.0
    %184 = vmatprep.subr.mxu0 0.0
    %185 = vmatpush2.msra.mxu0 0.0
    %186 = vmatprep.subr.mxu0 0.0
    %187 = vmatpush2.msra.mxu0 0.0
    %188 = vmatprep.subr.mxu0 0.0
    %189 = vmatpush2.msra.mxu0 0.0
    %190 = vmatprep.subr.mxu0 0.0
    %191 = vmatpush2.msra.mxu0 0.0
    %192 = vmatprep.subr.mxu0 0.0
    %193 = vmatpush2.msra.mxu0 0.0
    %194 = vmatprep.subr.mxu0 0.0
    %195 = vmatpush2.msra.mxu0 0.0
    %196 = vmatprep.subr.mxu0 0.0
    %197 = vmatpush2.msra.mxu0 0.0
    %198 = vmatprep.subr.mxu0 0.0
    %199 = vmatpush2.msra.mxu0 0.0
    %200 = vmatprep.subr.mxu0 0.0
    %201 = vmatpush2.msra.mxu0 0.0
    %202 = vmatprep.subr.mxu0 0.0
    %203 = vmatpush2.msra.mxu0 0.0
    %204 = vmatprep.subr.mxu0 0.0
    %205 = vmatpush2.msra.mxu0 0.0
    %206 = vmatprep.subr.mxu0 0.0
    %207 = vmatpush2.msra.mxu0 0.0
    %208 = vmatprep.subr.mxu0 0.0
    %209 = vmatpush2.msra.mxu0 0.0
    %210 = vmatprep.mubr.f32.mxu0 0.0
    %211 = vmatmul.mubr.f32.gmra.mxu0 %v140
    %v212 = vpop.f32.mrf.mxu0
    %v213 = vadd.f32 %v136, %v212
    %v214 = vpop.f32.mrf.mxu0
    %215 = vdwg.mxu0
    %v216 = vpack.c.bf16 %v213, %v213
    %v217 = vld [vmem:[%s4] sm:$0xf]
    %v218 = vld [vmem:[%s4 + $0x4] sm:$0xf]
    %v219 = vld [vmem:[%s4 + $0x8] sm:$0xf]
    %v220 = vld [vmem:[%s4 + $0xc] sm:$0xf]
    %v221 = vld [vmem:[%s4 + $0x10] sm:$0xf]
    %v222 = vld [vmem:[%s4 + $0x14] sm:$0xf]
    %v223 = vld [vmem:[%s4 + $0x18] sm:$0xf]
    %v224 = vld [vmem:[%s4 + $0x1c] sm:$0xf]
    %v225 = vld [vmem:[%s4 + $0x20] sm:$0xf]
    %v226 = vld [vmem:[%s4 + $0x24] sm:$0xf]
    %v227 = vld [vmem:[%s4 + $0x28] sm:$0xf]
    %v228 = vld [vmem:[%s4 + $0x2c] sm:$0xf]
    %v229 = vld [vmem:[%s4 + $0x30] sm:$0xf]
    %v230 = vld [vmem:[%s4 + $0x34] sm:$0xf]
    %v231 = vld [vmem:[%s4 + $0x38] sm:$0xf]
    %v232 = vld [vmem:[%s4 + $0x3c] sm:$0xf]
    %v233 = vld [vmem:[%s5] sm:$0x1]
    %v235 = vlaneseq
    %v236 = vshrl.u32 %v235, 7
    %v237 = vsub.s32 0, %v236
    %v238 = vrot.slane %v233, %v237
    %v256 = vunpack.c.l.b16 %v217
    %v257 = vunpack.c.l.b16 %v218
    %v258 = vunpack.c.l.b16 %v219
    %v259 = vunpack.c.l.b16 %v220
    %v260 = vunpack.c.l.b16 %v221
    %v261 = vunpack.c.l.b16 %v222
    %v262 = vunpack.c.l.b16 %v223
    %v263 = vunpack.c.l.b16 %v224
    %v264 = vunpack.c.l.b16 %v225
    %v265 = vunpack.c.l.b16 %v226
    %v266 = vunpack.c.l.b16 %v227
    %v267 = vunpack.c.l.b16 %v228
    %v268 = vunpack.c.l.b16 %v229
    %v269 = vunpack.c.l.b16 %v230
    %v270 = vunpack.c.l.b16 %v231
    %v271 = vunpack.c.l.b16 %v232
    %v272 = vpack.c.b16 %v257, %v256
    %v273 = vpack.c.b16 %v259, %v258
    %v274 = vpack.c.b16 %v261, %v260
    %v275 = vpack.c.b16 %v263, %v262
    %v276 = vpack.c.b16 %v265, %v264
    %v277 = vpack.c.b16 %v267, %v266
    %v278 = vpack.c.b16 %v269, %v268
    %v279 = vpack.c.b16 %v271, %v270
    %288 = vmatprep.subr.bf16.mxu0 0
    %289 = vmatpush1.bf16.msra.mxu0 %v279
    %290 = vmatprep.subr.bf16.mxu0 0
    %291 = vmatpush1.bf16.msra.mxu0 %v278
    %292 = vmatprep.subr.bf16.mxu0 0
    %293 = vmatpush1.bf16.msra.mxu0 %v277
    %294 = vmatprep.subr.bf16.mxu0 0
    %295 = vmatpush1.bf16.msra.mxu0 %v276
    %296 = vmatprep.subr.bf16.mxu0 0
    %297 = vmatpush1.bf16.msra.mxu0 %v275
    %298 = vmatprep.subr.bf16.mxu0 0
    %299 = vmatpush1.bf16.msra.mxu0 %v274
    %300 = vmatprep.subr.bf16.mxu0 0
    %301 = vmatpush1.bf16.msra.mxu0 %v273
    %302 = vmatprep.subr.bf16.mxu0 0
    %303 = vmatpush1.bf16.msra.mxu0 %v272
    %304 = vmatprep.subr.bf16.mxu0 0
    %305 = vmatpush2.bf16.msra.mxu0 0
    %306 = vmatprep.subr.bf16.mxu0 0
    %307 = vmatpush2.bf16.msra.mxu0 0
    %308 = vmatprep.subr.bf16.mxu0 0
    %309 = vmatpush2.bf16.msra.mxu0 0
    %310 = vmatprep.subr.bf16.mxu0 0
    %311 = vmatpush2.bf16.msra.mxu0 0
    %312 = vmatprep.subr.bf16.mxu0 0
    %313 = vmatpush2.bf16.msra.mxu0 0
    %314 = vmatprep.subr.bf16.mxu0 0
    %315 = vmatpush2.bf16.msra.mxu0 0
    %316 = vmatprep.subr.bf16.mxu0 0
    %317 = vmatpush2.bf16.msra.mxu0 0
    %318 = vmatprep.subr.bf16.mxu0 0
    %319 = vmatpush2.bf16.msra.mxu0 0
    %320 = vmatprep.mubr.bf16.mxu0 0
    %321 = vmatmul.mubr.bf16.gmra.mxu0 %v216
    %v322 = vpop.f32.mrf.mxu0
    %v323 = vadd.f32 %v238, %v322
    %v324 = vpop.f32.mrf.mxu0
    %v325 = vpop.f32.mrf.mxu0
    %v326 = vpop.f32.mrf.mxu0
    %327 = vdwg.mxu0
    %328 = vst [vmem:[#allocation2] sm:$0x3] %v323
    // Predicated region
    $region26: #{base_model_forward.3} parent=1 // pred_check
      _
    $region27: #{base_model_forward.3} parent=1 // pred_check_branch
      %330 = sbr.rel (0) target = $region29
    $region28: #{base_model_forward.3} parent=1 // pred_region
      %s332 = ssub.s32 32, 32
      %333 = vsyncadd [#allocation3], %s332
      %s335 = sshll.u32 [#allocation2], 4
      %s336 = int_to_ptr.vmem [resolvable:$true] %s335
      %338 = dma.vmem_to_hbm [thread:$0]  %s336, 32, %s6, [#allocation3]
    $region29: #{base_model_forward.3} parent=1 // pred_fallthru
      _
    // Predicated region
    $region30: #{base_model_forward.3} parent=1 // pred_check
      _
    $region31: #{base_model_forward.3} parent=1 // pred_check_branch
      %340 = sbr.rel (0) target = $region33
    $region32: #{base_model_forward.3} parent=1 // pred_region
      %341 = dma.done [#allocation3], 32
    $region33: #{base_model_forward.3} parent=1 // pred_fallthru
      _
    %342 = vsyncpa [#allocation3], 1

// kernel: base_model_forward.2
$region0: #{base_model_forward.2}
  #allocation0 [shape = 'u32[]', space=smem, size = 0x4, offset = 0x4, fixed_abs, tag = 'smem constant byte address 0x4 - core index']
  #allocation1 [shape = 'u32[144,128]{1,0:T(1,128)}', space=vmem, size = 0x12000, scoped, tag = 'internal scratch']
  %s0 = inlined_call_operand.vmem [shape: bf16[2,18,18,4], index: 0, kind: input, shape index: {}]
  %s1 = inlined_call_operand.vmem [shape: bf16[128,128], index: 1, kind: input, shape index: {}]
  %s2 = inlined_call_operand.vmem [shape: f32[1,128], index: 2, kind: input, shape index: {}]
  %s3 = inlined_call_operand.vmem [shape: f32[2,1,128], index: 3, kind: output, shape index: {}]
  %s4 = sld [smem:[#allocation0]]
  $region45: #{base_model_forward.2} parent=0
    _
  %s6 = ssub.s32 1, %s4
  %s7 = scalar_select 0, %s6, %s4
  loop: start=0, step=1, limit=4
  $region2: #{base_model_forward.2} parent=0 // loop_pre_header
    _
  $region3: #{base_model_forward.2} parent=0 // loop_header
    %s9 = sphi 0, %s13
    %p10 = scmp.ge.s32.totalorder %s9, 4
    %s19 = sphi 0, %s21
    %s22 = sphi 0, %s19
    %s23 = sphi 0, %s22
    %s39 = sphi 0, %s23
    %s43 = sphi 0, %s43
    %s45 = sphi 0, %s43
    %s46 = sphi 0, %s45
    %s60 = sphi 0, %s46
    %s64 = sphi 0, %s64
    %s66 = sphi 0, %s64
    %s67 = sphi 0, %s66
    %s81 = sphi 0, %s67
    %s87 = sphi 0, %s89
    %s90 = sphi 0, %s87
    %s91 = sphi 0, %s90
    %s107 = sphi 0, %s91
  $region4: #{base_model_forward.2} parent=0 // loop_header_branch
    %12 = sbr.rel (%p10) target = $region8
  $region5: #{base_model_forward.2} parent=0 // loop_body
    %s14 = ssub.s32 %s9, 1
    %s15 = ssub.s32 %s9, 2
    %s16 = sadd.s32 %s9, 1
    %s17 = ssub.s32 %s9, %s16
    %p18 = scmp.eq.s32.totalorder %s17, 0
    %s20 = sadd.s32 %s19, 1
    %s21 = scalar_select %p18, %s19, %s20
    %p24 = pneg %p18
    %p25 = scmp.eq.s32.totalorder %s9, 1
    %p26 = por %p24, %p25
    %p27 = scmp.ne.s32.totalorder %s19, %s22
    %p28 = scmp.eq.s32.totalorder %s9, 0
    %p29 = por %p27, %p28
    %p30 = scmp.ne.s32.totalorder %s19, %s22
    %p31 = scmp.eq.s32.totalorder %s14, 1
    %p32 = por %p30, %p31
    %p33 = scmp.ne.s32.totalorder %s22, %s23
    %p34 = scmp.eq.s32.totalorder %s14, 0
    %p35 = por %p33, %p34
    %p36 = scmp.ne.s32.totalorder %s22, %s23
    %p37 = scmp.eq.s32.totalorder %s15, 1
    %p38 = por %p36, %p37
    %p40 = scmp.ne.s32.totalorder %s23, %s39
    %p41 = scmp.eq.s32.totalorder %s15, 0
    %p42 = por %p40, %p41
    %s44 = sadd.s32 %s43, 1
    %p47 = scmp.eq.s32.totalorder %s9, 1
    %p48 = scmp.ne.s32.totalorder %s43, %s45
    %p49 = scmp.eq.s32.totalorder %s9, 0
    %p50 = por %p48, %p49
    %p51 = scmp.ne.s32.totalorder %s43, %s45
    %p52 = scmp.eq.s32.totalorder %s14, 1
    %p53 = por %p51, %p52
    %p54 = scmp.ne.s32.totalorder %s45, %s46
    %p55 = scmp.eq.s32.totalorder %s14, 0
    %p56 = por %p54, %p55
    %p57 = scmp.ne.s32.totalorder %s45, %s46
    %p58 = scmp.eq.s32.totalorder %s15, 1
    %p59 = por %p57, %p58
    %p61 = scmp.ne.s32.totalorder %s46, %s60
    %p62 = scmp.eq.s32.totalorder %s15, 0
    %p63 = por %p61, %p62
    %s65 = sadd.s32 %s64, 1
    %p68 = scmp.eq.s32.totalorder %s9, 1
    %p69 = scmp.ne.s32.totalorder %s64, %s66
    %p70 = scmp.eq.s32.totalorder %s9, 0
    %p71 = por %p69, %p70
    %p72 = scmp.ne.s32.totalorder %s64, %s66
    %p73 = scmp.eq.s32.totalorder %s14, 1
    %p74 = por %p72, %p73
    %p75 = scmp.ne.s32.totalorder %s66, %s67
    %p76 = scmp.eq.s32.totalorder %s14, 0
    %p77 = por %p75, %p76
    %p78 = scmp.ne.s32.totalorder %s66, %s67
    %p79 = scmp.eq.s32.totalorder %s15, 1
    %p80 = por %p78, %p79
    %p82 = scmp.ne.s32.totalorder %s67, %s81
    %p83 = scmp.eq.s32.totalorder %s15, 0
    %p84 = por %p82, %p83
    %s85 = ssub.s32 %s9, %s16
    %p86 = scmp.eq.s32.totalorder %s85, 0
    %s88 = sadd.s32 %s87, 1
    %s89 = scalar_select %p86, %s87, %s88
    %p92 = pneg %p86
    %p93 = scmp.eq.s32.totalorder %s9, 1
    %p94 = por %p92, %p93
    %p95 = scmp.ne.s32.totalorder %s87, %s90
    %p96 = scmp.eq.s32.totalorder %s9, 0
    %p97 = por %p95, %p96
    %p98 = scmp.ne.s32.totalorder %s87, %s90
    %p99 = scmp.eq.s32.totalorder %s14, 1
    %p100 = por %p98, %p99
    %p101 = scmp.ne.s32.totalorder %s90, %s91
    %p102 = scmp.eq.s32.totalorder %s14, 0
    %p103 = por %p101, %p102
    %p104 = scmp.ne.s32.totalorder %s90, %s91
    %p105 = scmp.eq.s32.totalorder %s15, 1
    %p106 = por %p104, %p105
    %p108 = scmp.ne.s32.totalorder %s91, %s107
    %p109 = scmp.eq.s32.totalorder %s15, 0
    %p110 = por %p108, %p109
    %p111 = scmp.le.s32.totalorder 1, %s9
    %p112 = scmp.lt.s32.totalorder %s9, 3
    %p113 = pnand %p111, %p112
    %p114 = pneg %p113
    // Predicated region
    $region9: #{base_model_forward.2} parent=5 // pred_check
      _
    $region10: #{base_model_forward.2} parent=5 // pred_check_branch
      %116 = sbr.rel (%p113) target = $region12
    $region11: #{base_model_forward.2} parent=5 // pred_region
      %s117 = ssub.s32 %s9, 1
      // Predicated region
      $region13: #{base_model_forward.2} parent=11 // pred_check
        %p118 = pneg %p56
      $region14: #{base_model_forward.2} parent=11 // pred_check_branch
        %120 = sbr.rel (%p118) target = $region16
      $region15: #{base_model_forward.2} parent=11 // pred_region
        _
      $region16: #{base_model_forward.2} parent=11 // pred_fallthru
        _
      // Predicated region
      $region17: #{base_model_forward.2} parent=11 // pred_check
        %p121 = pneg %p77
      $region18: #{base_model_forward.2} parent=11 // pred_check_branch
        %123 = sbr.rel (%p121) target = $region20
      $region19: #{base_model_forward.2} parent=11 // pred_region
        _
      $region20: #{base_model_forward.2} parent=11 // pred_fallthru
        _
    $region12: #{base_model_forward.2} parent=5 // pred_fallthru
      _
    %p124 = scmp.lt.s32.totalorder %s9, 2
    // Predicated region
    $region21: #{base_model_forward.2} parent=5 // pred_check
      %p125 = pneg %p124
    $region22: #{base_model_forward.2} parent=5 // pred_check_branch
      %127 = sbr.rel (%p125) target = $region24
    $region23: #{base_model_forward.2} parent=5 // pred_region
      // Predicated region
      $region25: #{base_model_forward.2} parent=23 // pred_check
        %p128 = pneg %p29
      $region26: #{base_model_forward.2} parent=23 // pred_check_branch
        %130 = sbr.rel (%p128) target = $region28
      $region27: #{base_model_forward.2} parent=23 // pred_region
        %p131 = scmp.lt.s32.totalorder %s9, 1
        %s132 = scalar_select %p131, %s9, 1
        %s133 = smul.addr %s132, 54
        %s134 = smul.addr %s133, 4
        %s135 = scalar_lea.vmem %s0, %s134
      $region28: #{base_model_forward.2} parent=23 // pred_fallthru
        _
    $region24: #{base_model_forward.2} parent=5 // pred_fallthru
      _
    %p136 = scmp.le.s32.totalorder 1, %s9
    %p137 = scmp.lt.s32.totalorder %s9, 3
    %p138 = pnand %p136, %p137
    %p139 = pneg %p138
    // Predicated region
    $region29: #{base_model_forward.2} parent=5 // pred_check
      _
    $region30: #{base_model_forward.2} parent=5 // pred_check_branch
      %141 = sbr.rel (%p138) target = $region32
    $region31: #{base_model_forward.2} parent=5 // pred_region
      %s142 = ssub.s32 %s9, 1
      %p143 = scmp.lt.s32.totalorder %s14, 1
      %s144 = scalar_select %p143, %s14, 1
      %s145 = smul.addr %s144, 54
      %s146 = smul.addr %s145, 4
      %s147 = scalar_lea.vmem %s0, %s146
      %p148 = pneg %p35
      %p149 = pneg %p32
      %p150 = pneg %p56
      %p151 = pneg %p53
      %p152 = pneg %p77
      %p153 = pneg %p74
      %p154 = pneg %p103
      %p155 = pneg %p100
      %p156 = scmp.lt.s32.totalorder %s14, 1
      %s157 = scalar_select %p156, %s14, 1
      %s158 = scalar_lea.vmem %s3, %s157
      %p159 = scmp.lt.s32.totalorder %s14, 1
      %s160 = scalar_select %p159, %s14, 1
      %s161 = smul.addr %s160, 54
      %s162 = smul.addr %s161, 4
      %s163 = scalar_lea.vmem %s0, %s162
      %p164 = scmp.lt.s32.totalorder %s14, 1
      %s165 = scalar_select %p164, %s14, 1
      %s166 = scalar_lea.vmem %s3, %s165
      %v168 = vld [vmem:[%s163] sm:$0xf]
      %v169 = vld [vmem:[%s163 + $0x4] sm:$0xf]
      %v170 = vld [vmem:[%s163 + $0x8] sm:$0x1]
      %v171 = vld [vmem:[%s163 + $0xc] sm:$0xf]
      %v172 = vld [vmem:[%s163 + $0x10] sm:$0xf]
      %v173 = vld [vmem:[%s163 + $0x14] sm:$0x1]
      %v174 = vld [vmem:[%s163 + $0x18] sm:$0xf]
      %v175 = vld [vmem:[%s163 + $0x1c] sm:$0xf]
      %v176 = vld [vmem:[%s163 + $0x20] sm:$0x1]
      %v177 = vld [vmem:[%s163 + $0x24] sm:$0xf]
      %v178 = vld [vmem:[%s163 + $0x28] sm:$0xf]
      %v179 = vld [vmem:[%s163 + $0x2c] sm:$0x1]
      %v180 = vld [vmem:[%s163 + $0x30] sm:$0xf]
      %v181 = vld [vmem:[%s163 + $0x34] sm:$0xf]
      %v182 = vld [vmem:[%s163 + $0x38] sm:$0x1]
      %v183 = vld [vmem:[%s163 + $0x3c] sm:$0xf]
      %v184 = vld [vmem:[%s163 + $0x40] sm:$0xf]
      %v185 = vld [vmem:[%s163 + $0x44] sm:$0x1]
      %v186 = vld [vmem:[%s163 + $0x48] sm:$0xf]
      %v187 = vld [vmem:[%s163 + $0x4c] sm:$0xf]
      %v188 = vld [vmem:[%s163 + $0x50] sm:$0x1]
      %v189 = vld [vmem:[%s163 + $0x54] sm:$0xf]
      %v190 = vld [vmem:[%s163 + $0x58] sm:$0xf]
      %v191 = vld [vmem:[%s163 + $0x5c] sm:$0x1]
      %v192 = vld [vmem:[%s163 + $0x60] sm:$0xf]
      %v193 = vld [vmem:[%s163 + $0x64] sm:$0xf]
      %v194 = vld [vmem:[%s163 + $0x68] sm:$0x1]
      %v195 = vld [vmem:[%s163 + $0x6c] sm:$0xf]
      %v196 = vld [vmem:[%s163 + $0x70] sm:$0xf]
      %v197 = vld [vmem:[%s163 + $0x74] sm:$0x1]
      %v198 = vld [vmem:[%s163 + $0x78] sm:$0xf]
      %v199 = vld [vmem:[%s163 + $0x7c] sm:$0xf]
      %v200 = vld [vmem:[%s163 + $0x80] sm:$0x1]
      %v201 = vld [vmem:[%s163 + $0x84] sm:$0xf]
      %v202 = vld [vmem:[%s163 + $0x88] sm:$0xf]
      %v203 = vld [vmem:[%s163 + $0x8c] sm:$0x1]
      %v204 = vld [vmem:[%s163 + $0x90] sm:$0xf]
      %v205 = vld [vmem:[%s163 + $0x94] sm:$0xf]
      %v206 = vld [vmem:[%s163 + $0x98] sm:$0x1]
      %v207 = vld [vmem:[%s163 + $0x9c] sm:$0xf]
      %v208 = vld [vmem:[%s163 + $0xa0] sm:$0xf]
      %v209 = vld [vmem:[%s163 + $0xa4] sm:$0x1]
      %v210 = vld [vmem:[%s163 + $0xa8] sm:$0xf]
      %v211 = vld [vmem:[%s163 + $0xac] sm:$0xf]
      %v212 = vld [vmem:[%s163 + $0xb0] sm:$0x1]
      %v213 = vld [vmem:[%s163 + $0xb4] sm:$0xf]
      %v214 = vld [vmem:[%s163 + $0xb8] sm:$0xf]
      %v215 = vld [vmem:[%s163 + $0xbc] sm:$0x1]
      %v216 = vld [vmem:[%s163 + $0xc0] sm:$0xf]
      %v217 = vld [vmem:[%s163 + $0xc4] sm:$0xf]
      %v218 = vld [vmem:[%s163 + $0xc8] sm:$0x1]
      %v219 = vld [vmem:[%s163 + $0xcc] sm:$0xf]
      %v220 = vld [vmem:[%s163 + $0xd0] sm:$0xf]
      %v221 = vld [vmem:[%s163 + $0xd4] sm:$0x1]
      %v254 = vunpack.c.l.b16 %v168
      %v255 = vunpack.c.l.b16 %v169
      %v256 = vunpack.c.l.b16 %v171
      %v257 = vunpack.c.l.b16 %v172
      %v258 = vunpack.c.l.b16 %v174
      %v259 = vunpack.c.l.b16 %v175
      %v260 = vunpack.c.l.b16 %v177
      %v261 = vunpack.c.l.b16 %v178
      %v262 = vunpack.c.l.b16 %v180
      %v263 = vunpack.c.l.b16 %v181
      %v264 = vunpack.c.l.b16 %v183
      %v265 = vunpack.c.l.b16 %v184
      %v266 = vunpack.c.l.b16 %v186
      %v267 = vunpack.c.l.b16 %v187
      %v268 = vunpack.c.l.b16 %v189
      %v269 = vunpack.c.l.b16 %v190
      %v270 = vunpack.c.l.b16 %v192
      %v271 = vunpack.c.l.b16 %v193
      %v272 = vunpack.c.l.b16 %v195
      %v273 = vunpack.c.l.b16 %v196
      %v274 = vunpack.c.l.b16 %v198
      %v275 = vunpack.c.l.b16 %v199
      %v276 = vunpack.c.l.b16 %v201
      %v277 = vunpack.c.l.b16 %v202
      %v278 = vunpack.c.l.b16 %v204
      %v279 = vunpack.c.l.b16 %v205
      %v280 = vunpack.c.l.b16 %v207
      %v281 = vunpack.c.l.b16 %v208
      %v282 = vunpack.c.l.b16 %v210
      %v283 = vunpack.c.l.b16 %v211
      %v284 = vunpack.c.l.b16 %v213
      %v285 = vunpack.c.l.b16 %v214
      %v286 = vpack.c.b16 %v255, %v254
      %v287 = vpack.c.b16 %v257, %v256
      %v288 = vpack.c.b16 %v259, %v258
      %v289 = vpack.c.b16 %v261, %v260
      %v290 = vpack.c.b16 %v263, %v262
      %v291 = vpack.c.b16 %v265, %v264
      %v292 = vpack.c.b16 %v267, %v266
      %v293 = vpack.c.b16 %v269, %v268
      %v294 = vpack.c.b16 %v271, %v270
      %v295 = vpack.c.b16 %v273, %v272
      %v296 = vpack.c.b16 %v275, %v274
      %v297 = vpack.c.b16 %v277, %v276
      %v298 = vpack.c.b16 %v279, %v278
      %v299 = vpack.c.b16 %v281, %v280
      %v300 = vpack.c.b16 %v283, %v282
      %v301 = vpack.c.b16 %v285, %v284
      %v318 = vunpack.c.l.b16 %v170
      %v319 = vunpack.c.l.b16 %v173
      %v320 = vunpack.c.l.b16 %v176
      %v321 = vunpack.c.l.b16 %v179
      %v322 = vunpack.c.l.b16 %v182
      %v323 = vunpack.c.l.b16 %v185
      %v324 = vunpack.c.l.b16 %v188
      %v325 = vunpack.c.l.b16 %v191
      %v326 = vunpack.c.l.b16 %v194
      %v327 = vunpack.c.l.b16 %v197
      %v328 = vunpack.c.l.b16 %v200
      %v329 = vunpack.c.l.b16 %v203
      %v330 = vunpack.c.l.b16 %v206
      %v331 = vunpack.c.l.b16 %v209
      %v332 = vunpack.c.l.b16 %v212
      %v333 = vunpack.c.l.b16 %v215
      %v334 = vpack.c.b16 %v318, %v318
      %v335 = vpack.c.b16 %v319, %v319
      %v336 = vpack.c.b16 %v320, %v320
      %v337 = vpack.c.b16 %v321, %v321
      %v338 = vpack.c.b16 %v322, %v322
      %v339 = vpack.c.b16 %v323, %v323
      %v340 = vpack.c.b16 %v324, %v324
      %v341 = vpack.c.b16 %v325, %v325
      %v342 = vpack.c.b16 %v326, %v326
      %v343 = vpack.c.b16 %v327, %v327
      %v344 = vpack.c.b16 %v328, %v328
      %v345 = vpack.c.b16 %v329, %v329
      %v346 = vpack.c.b16 %v330, %v330
      %v347 = vpack.c.b16 %v331, %v331
      %v348 = vpack.c.b16 %v332, %v332
      %v349 = vpack.c.b16 %v333, %v333
      %vm350 = vsmask.f32 7424
      %v352 = vshrl.u32 %v286, 16
      %v354 = vshll.u32 %v286, 16
      %v356 = vrot.slane %v354, 1
      %v357 = vor.u32 %v352, %v356
      %v359 = vshll.u32 %v334, 16
      %v361 = vrot.slane %v359, 1
      %v362 = vsel %vm350, %v357, %v361
      %v364 = vshrl.u32 %v287, 16
      %v366 = vshll.u32 %v287, 16
      %v368 = vrot.slane %v366, 1
      %v369 = vor.u32 %v364, %v368
      %v371 = vshll.u32 %v335, 16
      %v373 = vrot.slane %v371, 1
      %v374 = vsel %vm350, %v369, %v373
      %v376 = vshrl.u32 %v288, 16
      %v378 = vshll.u32 %v288, 16
      %v380 = vrot.slane %v378, 1
      %v381 = vor.u32 %v376, %v380
      %v383 = vshll.u32 %v336, 16
      %v385 = vrot.slane %v383, 1
      %v386 = vsel %vm350, %v381, %v385
      %v388 = vshrl.u32 %v289, 16
      %v390 = vshll.u32 %v289, 16
      %v392 = vrot.slane %v390, 1
      %v393 = vor.u32 %v388, %v392
      %v395 = vshll.u32 %v337, 16
      %v397 = vrot.slane %v395, 1
      %v398 = vsel %vm350, %v393, %v397
      %v400 = vshrl.u32 %v290, 16
      %v402 = vshll.u32 %v290, 16
      %v404 = vrot.slane %v402, 1
      %v405 = vor.u32 %v400, %v404
      %v407 = vshll.u32 %v338, 16
      %v409 = vrot.slane %v407, 1
      %v410 = vsel %vm350, %v405, %v409
      %v412 = vshrl.u32 %v291, 16
      %v414 = vshll.u32 %v291, 16
      %v416 = vrot.slane %v414, 1
      %v417 = vor.u32 %v412, %v416
      %v419 = vshll.u32 %v339, 16
      %v421 = vrot.slane %v419, 1
      %v422 = vsel %vm350, %v417, %v421
      %v424 = vshrl.u32 %v292, 16
      %v426 = vshll.u32 %v292, 16
      %v428 = vrot.slane %v426, 1
      %v429 = vor.u32 %v424, %v428
      %v431 = vshll.u32 %v340, 16
      %v433 = vrot.slane %v431, 1
      %v434 = vsel %vm350, %v429, %v433
      %v436 = vshrl.u32 %v293, 16
      %v438 = vshll.u32 %v293, 16
      %v440 = vrot.slane %v438, 1
      %v441 = vor.u32 %v436, %v440
      %v443 = vshll.u32 %v341, 16
      %v445 = vrot.slane %v443, 1
      %v446 = vsel %vm350, %v441, %v445
      %v448 = vshrl.u32 %v294, 16
      %v450 = vshll.u32 %v294, 16
      %v452 = vrot.slane %v450, 1
      %v453 = vor.u32 %v448, %v452
      %v455 = vshll.u32 %v342, 16
      %v457 = vrot.slane %v455, 1
      %v458 = vsel %vm350, %v453, %v457
      %v460 = vshrl.u32 %v295, 16
      %v462 = vshll.u32 %v295, 16
      %v464 = vrot.slane %v462, 1
      %v465 = vor.u32 %v460, %v464
      %v467 = vshll.u32 %v343, 16
      %v469 = vrot.slane %v467, 1
      %v470 = vsel %vm350, %v465, %v469
      %v472 = vshrl.u32 %v296, 16
      %v474 = vshll.u32 %v296, 16
      %v476 = vrot.slane %v474, 1
      %v477 = vor.u32 %v472, %v476
      %v479 = vshll.u32 %v344, 16
      %v481 = vrot.slane %v479, 1
      %v482 = vsel %vm350, %v477, %v481
      %v484 = vshrl.u32 %v297, 16
      %v486 = vshll.u32 %v297, 16
      %v488 = vrot.slane %v486, 1
      %v489 = vor.u32 %v484, %v488
      %v491 = vshll.u32 %v345, 16
      %v493 = vrot.slane %v491, 1
      %v494 = vsel %vm350, %v489, %v493
      %v496 = vshrl.u32 %v298, 16
      %v498 = vshll.u32 %v298, 16
      %v500 = vrot.slane %v498, 1
      %v501 = vor.u32 %v496, %v500
      %v503 = vshll.u32 %v346, 16
      %v505 = vrot.slane %v503, 1
      %v506 = vsel %vm350, %v501, %v505
      %v508 = vshrl.u32 %v299, 16
      %v510 = vshll.u32 %v299, 16
      %v512 = vrot.slane %v510, 1
      %v513 = vor.u32 %v508, %v512
      %v515 = vshll.u32 %v347, 16
      %v517 = vrot.slane %v515, 1
      %v518 = vsel %vm350, %v513, %v517
      %v520 = vshrl.u32 %v300, 16
      %v522 = vshll.u32 %v300, 16
      %v524 = vrot.slane %v522, 1
      %v525 = vor.u32 %v520, %v524
      %v527 = vshll.u32 %v348, 16
      %v529 = vrot.slane %v527, 1
      %v530 = vsel %vm350, %v525, %v529
      %v532 = vshrl.u32 %v301, 16
      %v534 = vshll.u32 %v301, 16
      %v536 = vrot.slane %v534, 1
      %v537 = vor.u32 %v532, %v536
      %v539 = vshll.u32 %v349, 16
      %v541 = vrot.slane %v539, 1
      %v542 = vsel %vm350, %v537, %v541
      %543 = vrot.lane.b32.xlu0 %v362, 4
      %v544 = vpop.permute.xlu0 %543
      %545 = vrot.lane.b32.xlu0 %v374, 4
      %v546 = vpop.permute.xlu0 %545
      %547 = vrot.lane.b32.xlu0 %v386, 4
      %v548 = vpop.permute.xlu0 %547
      %549 = vrot.lane.b32.xlu0 %v398, 4
      %v550 = vpop.permute.xlu0 %549
      %551 = vrot.lane.b32.xlu0 %v410, 4
      %v552 = vpop.permute.xlu0 %551
      %553 = vrot.lane.b32.xlu0 %v422, 4
      %v554 = vpop.permute.xlu0 %553
      %555 = vrot.lane.b32.xlu0 %v434, 4
      %v556 = vpop.permute.xlu0 %555
      %557 = vrot.lane.b32.xlu0 %v446, 4
      %v558 = vpop.permute.xlu0 %557
      %559 = vrot.lane.b32.xlu0 %v458, 4
      %v560 = vpop.permute.xlu0 %559
      %561 = vrot.lane.b32.xlu0 %v470, 4
      %v562 = vpop.permute.xlu0 %561
      %563 = vrot.lane.b32.xlu0 %v482, 4
      %v564 = vpop.permute.xlu0 %563
      %565 = vrot.lane.b32.xlu0 %v494, 4
      %v566 = vpop.permute.xlu0 %565
      %567 = vrot.lane.b32.xlu0 %v506, 4
      %v568 = vpop.permute.xlu0 %567
      %569 = vrot.lane.b32.xlu0 %v518, 4
      %v570 = vpop.permute.xlu0 %569
      %571 = vrot.lane.b32.xlu0 %v530, 4
      %v572 = vpop.permute.xlu0 %571
      %573 = vrot.lane.b32.xlu0 %v542, 4
      %v574 = vpop.permute.xlu0 %573
      %vm575 = vcmask 1046528
      %v576 = vrot.slane %v286, 1
      %v577 = vrot.slane %v334, 1
      %v578 = vsel %vm575, %v576, %v577
      %v579 = vrot.slane %v287, 1
      %v580 = vrot.slane %v335, 1
      %v581 = vsel %vm575, %v579, %v580
      %v582 = vrot.slane %v288, 1
      %v583 = vrot.slane %v336, 1
      %v584 = vsel %vm575, %v582, %v583
      %v585 = vrot.slane %v289, 1
      %v586 = vrot.slane %v337, 1
      %v587 = vsel %vm575, %v585, %v586
      %v588 = vrot.slane %v290, 1
      %v589 = vrot.slane %v338, 1
      %v590 = vsel %vm575, %v588, %v589
      %v591 = vrot.slane %v291, 1
      %v592 = vrot.slane %v339, 1
      %v593 = vsel %vm575, %v591, %v592
      %v594 = vrot.slane %v292, 1
      %v595 = vrot.slane %v340, 1
      %v596 = vsel %vm575, %v594, %v595
      %v597 = vrot.slane %v293, 1
      %v598 = vrot.slane %v341, 1
      %v599 = vsel %vm575, %v597, %v598
      %v600 = vrot.slane %v294, 1
      %v601 = vrot.slane %v342, 1
      %v602 = vsel %vm575, %v600, %v601
      %v603 = vrot.slane %v295, 1
      %v604 = vrot.slane %v343, 1
      %v605 = vsel %vm575, %v603, %v604
      %v606 = vrot.slane %v296, 1
      %v607 = vrot.slane %v344, 1
      %v608 = vsel %vm575, %v606, %v607
      %v609 = vrot.slane %v297, 1
      %v610 = vrot.slane %v345, 1
      %v611 = vsel %vm575, %v609, %v610
      %v612 = vrot.slane %v298, 1
      %v613 = vrot.slane %v346, 1
      %v614 = vsel %vm575, %v612, %v613
      %v615 = vrot.slane %v299, 1
      %v616 = vrot.slane %v347, 1
      %v617 = vsel %vm575, %v615, %v616
      %v618 = vrot.slane %v300, 1
      %v619 = vrot.slane %v348, 1
      %v620 = vsel %vm575, %v618, %v619
      %v621 = vrot.slane %v301, 1
      %v622 = vrot.slane %v349, 1
      %v623 = vsel %vm575, %v621, %v622
      %624 = vrot.lane.b32.xlu0 %v578, 8
      %v625 = vpop.permute.xlu0 %624
      %626 = vrot.lane.b32.xlu0 %v581, 8
      %v627 = vpop.permute.xlu0 %626
      %628 = vrot.lane.b32.xlu0 %v584, 8
      %v629 = vpop.permute.xlu0 %628
      %630 = vrot.lane.b32.xlu0 %v587, 8
      %v631 = vpop.permute.xlu0 %630
      %632 = vrot.lane.b32.xlu0 %v590, 8
      %v633 = vpop.permute.xlu0 %632
      %634 = vrot.lane.b32.xlu0 %v593, 8
      %v635 = vpop.permute.xlu0 %634
      %636 = vrot.lane.b32.xlu0 %v596, 8
      %v637 = vpop.permute.xlu0 %636
      %638 = vrot.lane.b32.xlu0 %v599, 8
      %v639 = vpop.permute.xlu0 %638
      %640 = vrot.lane.b32.xlu0 %v602, 8
      %v641 = vpop.permute.xlu0 %640
      %642 = vrot.lane.b32.xlu0 %v605, 8
      %v643 = vpop.permute.xlu0 %642
      %644 = vrot.lane.b32.xlu0 %v608, 8
      %v645 = vpop.permute.xlu0 %644
      %646 = vrot.lane.b32.xlu0 %v611, 8
      %v647 = vpop.permute.xlu0 %646
      %648 = vrot.lane.b32.xlu0 %v614, 8
      %v649 = vpop.permute.xlu0 %648
      %650 = vrot.lane.b32.xlu0 %v617, 8
      %v651 = vpop.permute.xlu0 %650
      %652 = vrot.lane.b32.xlu0 %v620, 8
      %v653 = vpop.permute.xlu0 %652
      %654 = vrot.lane.b32.xlu0 %v623, 8
      %v655 = vpop.permute.xlu0 %654
      %v658 = vunpack.c.l.b16 %v216
      %v659 = vunpack.c.l.b16 %v217
      %v660 = vpack.c.b16 %v659, %v658
      %661 = vrot.lane.b32.xlu0 %v287, 12
      %v662 = vpop.permute.xlu0 %661
      %663 = vrot.lane.b32.xlu0 %v288, 12
      %v664 = vpop.permute.xlu0 %663
      %665 = vrot.lane.b32.xlu0 %v289, 12
      %v666 = vpop.permute.xlu0 %665
      %667 = vrot.lane.b32.xlu0 %v290, 12
      %v668 = vpop.permute.xlu0 %667
      %669 = vrot.lane.b32.xlu0 %v291, 12
      %v670 = vpop.permute.xlu0 %669
      %671 = vrot.lane.b32.xlu0 %v292, 12
      %v672 = vpop.permute.xlu0 %671
      %673 = vrot.lane.b32.xlu0 %v293, 12
      %v674 = vpop.permute.xlu0 %673
      %675 = vrot.lane.b32.xlu0 %v294, 12
      %v676 = vpop.permute.xlu0 %675
      %677 = vrot.lane.b32.xlu0 %v295, 12
      %v678 = vpop.permute.xlu0 %677
      %679 = vrot.lane.b32.xlu0 %v296, 12
      %v680 = vpop.permute.xlu0 %679
      %681 = vrot.lane.b32.xlu0 %v297, 12
      %v682 = vpop.permute.xlu0 %681
      %683 = vrot.lane.b32.xlu0 %v298, 12
      %v684 = vpop.permute.xlu0 %683
      %685 = vrot.lane.b32.xlu0 %v299, 12
      %v686 = vpop.permute.xlu0 %685
      %687 = vrot.lane.b32.xlu0 %v300, 12
      %v688 = vpop.permute.xlu0 %687
      %689 = vrot.lane.b32.xlu0 %v301, 12
      %v690 = vpop.permute.xlu0 %689
      %691 = vrot.lane.b32.xlu0 %v660, 12
      %v692 = vpop.permute.xlu0 %691
      %v694 = vunpack.c.l.b16 %v218
      %v695 = vpack.c.b16 %v694, %v694
      %v697 = vshrl.u32 %v660, 16
      %v699 = vshll.u32 %v660, 16
      %v701 = vrot.slane %v699, 1
      %v702 = vor.u32 %v697, %v701
      %v704 = vshll.u32 %v695, 16
      %v706 = vrot.slane %v704, 1
      %v707 = vsel %vm350, %v702, %v706
      %708 = vrot.lane.b32.xlu0 %v374, 16
      %v709 = vpop.permute.xlu0 %708
      %710 = vrot.lane.b32.xlu0 %v386, 16
      %v711 = vpop.permute.xlu0 %710
      %712 = vrot.lane.b32.xlu0 %v398, 16
      %v713 = vpop.permute.xlu0 %712
      %714 = vrot.lane.b32.xlu0 %v410, 16
      %v715 = vpop.permute.xlu0 %714
      %716 = vrot.lane.b32.xlu0 %v422, 16
      %v717 = vpop.permute.xlu0 %716
      %718 = vrot.lane.b32.xlu0 %v434, 16
      %v719 = vpop.permute.xlu0 %718
      %720 = vrot.lane.b32.xlu0 %v446, 16
      %v721 = vpop.permute.xlu0 %720
      %722 = vrot.lane.b32.xlu0 %v458, 16
      %v723 = vpop.permute.xlu0 %722
      %724 = vrot.lane.b32.xlu0 %v470, 16
      %v725 = vpop.permute.xlu0 %724
      %726 = vrot.lane.b32.xlu0 %v482, 16
      %v727 = vpop.permute.xlu0 %726
      %728 = vrot.lane.b32.xlu0 %v494, 16
      %v729 = vpop.permute.xlu0 %728
      %730 = vrot.lane.b32.xlu0 %v506, 16
      %v731 = vpop.permute.xlu0 %730
      %732 = vrot.lane.b32.xlu0 %v518, 16
      %v733 = vpop.permute.xlu0 %732
      %734 = vrot.lane.b32.xlu0 %v530, 16
      %v735 = vpop.permute.xlu0 %734
      %736 = vrot.lane.b32.xlu0 %v542, 16
      %v737 = vpop.permute.xlu0 %736
      %738 = vrot.lane.b32.xlu0 %v707, 16
      %v739 = vpop.permute.xlu0 %738
      %v740 = vrot.slane %v660, 1
      %v741 = vrot.slane %v695, 1
      %v742 = vsel %vm575, %v740, %v741
      %743 = vrot.lane.b32.xlu0 %v581, 20
      %v744 = vpop.permute.xlu0 %743
      %745 = vrot.lane.b32.xlu0 %v584, 20
      %v746 = vpop.permute.xlu0 %745
      %747 = vrot.lane.b32.xlu0 %v587, 20
      %v748 = vpop.permute.xlu0 %747
      %749 = vrot.lane.b32.xlu0 %v590, 20
      %v750 = vpop.permute.xlu0 %749
      %751 = vrot.lane.b32.xlu0 %v593, 20
      %v752 = vpop.permute.xlu0 %751
      %753 = vrot.lane.b32.xlu0 %v596, 20
      %v754 = vpop.permute.xlu0 %753
      %755 = vrot.lane.b32.xlu0 %v599, 20
      %v756 = vpop.permute.xlu0 %755
      %757 = vrot.lane.b32.xlu0 %v602, 20
      %v758 = vpop.permute.xlu0 %757
      %759 = vrot.lane.b32.xlu0 %v605, 20
      %v760 = vpop.permute.xlu0 %759
      %761 = vrot.lane.b32.xlu0 %v608, 20
      %v762 = vpop.permute.xlu0 %761
      %763 = vrot.lane.b32.xlu0 %v611, 20
      %v764 = vpop.permute.xlu0 %763
      %765 = vrot.lane.b32.xlu0 %v614, 20
      %v766 = vpop.permute.xlu0 %765
      %767 = vrot.lane.b32.xlu0 %v617, 20
      %v768 = vpop.permute.xlu0 %767
      %769 = vrot.lane.b32.xlu0 %v620, 20
      %v770 = vpop.permute.xlu0 %769
      %771 = vrot.lane.b32.xlu0 %v623, 20
      %v772 = vpop.permute.xlu0 %771
      %773 = vrot.lane.b32.xlu0 %v742, 20
      %v774 = vpop.permute.xlu0 %773
      %v777 = vunpack.c.l.b16 %v219
      %v778 = vunpack.c.l.b16 %v220
      %v779 = vpack.c.b16 %v778, %v777
      %780 = vrot.lane.b32.xlu0 %v288, 24
      %v781 = vpop.permute.xlu0 %780
      %782 = vrot.lane.b32.xlu0 %v289, 24
      %v783 = vpop.permute.xlu0 %782
      %784 = vrot.lane.b32.xlu0 %v290, 24
      %v785 = vpop.permute.xlu0 %784
      %786 = vrot.lane.b32.xlu0 %v291, 24
      %v787 = vpop.permute.xlu0 %786
      %788 = vrot.lane.b32.xlu0 %v292, 24
      %v789 = vpop.permute.xlu0 %788
      %790 = vrot.lane.b32.xlu0 %v293, 24
      %v791 = vpop.permute.xlu0 %790
      %792 = vrot.lane.b32.xlu0 %v294, 24
      %v793 = vpop.permute.xlu0 %792
      %794 = vrot.lane.b32.xlu0 %v295, 24
      %v795 = vpop.permute.xlu0 %794
      %796 = vrot.lane.b32.xlu0 %v296, 24
      %v797 = vpop.permute.xlu0 %796
      %798 = vrot.lane.b32.xlu0 %v297, 24
      %v799 = vpop.permute.xlu0 %798
      %800 = vrot.lane.b32.xlu0 %v298, 24
      %v801 = vpop.permute.xlu0 %800
      %802 = vrot.lane.b32.xlu0 %v299, 24
      %v803 = vpop.permute.xlu0 %802
      %804 = vrot.lane.b32.xlu0 %v300, 24
      %v805 = vpop.permute.xlu0 %804
      %806 = vrot.lane.b32.xlu0 %v301, 24
      %v807 = vpop.permute.xlu0 %806
      %808 = vrot.lane.b32.xlu0 %v660, 24
      %v809 = vpop.permute.xlu0 %808
      %810 = vrot.lane.b32.xlu0 %v779, 24
      %v811 = vpop.permute.xlu0 %810
      %v813 = vunpack.c.l.b16 %v221
      %v814 = vpack.c.b16 %v813, %v813
      %v816 = vshrl.u32 %v779, 16
      %v818 = vshll.u32 %v779, 16
      %v820 = vrot.slane %v818, 1
      %v821 = vor.u32 %v816, %v820
      %v823 = vshll.u32 %v814, 16
      %v825 = vrot.slane %v823, 1
      %v826 = vsel %vm350, %v821, %v825
      %827 = vrot.lane.b32.xlu0 %v386, 28
      %v828 = vpop.permute.xlu0 %827
      %829 = vrot.lane.b32.xlu0 %v398, 28
      %v830 = vpop.permute.xlu0 %829
      %831 = vrot.lane.b32.xlu0 %v410, 28
      %v832 = vpop.permute.xlu0 %831
      %833 = vrot.lane.b32.xlu0 %v422, 28
      %v834 = vpop.permute.xlu0 %833
      %835 = vrot.lane.b32.xlu0 %v434, 28
      %v836 = vpop.permute.xlu0 %835
      %837 = vrot.lane.b32.xlu0 %v446, 28
      %v838 = vpop.permute.xlu0 %837
      %839 = vrot.lane.b32.xlu0 %v458, 28
      %v840 = vpop.permute.xlu0 %839
      %841 = vrot.lane.b32.xlu0 %v470, 28
      %v842 = vpop.permute.xlu0 %841
      %843 = vrot.lane.b32.xlu0 %v482, 28
      %v844 = vpop.permute.xlu0 %843
      %845 = vrot.lane.b32.xlu0 %v494, 28
      %v846 = vpop.permute.xlu0 %845
      %847 = vrot.lane.b32.xlu0 %v506, 28
      %v848 = vpop.permute.xlu0 %847
      %849 = vrot.lane.b32.xlu0 %v518, 28
      %v850 = vpop.permute.xlu0 %849
      %851 = vrot.lane.b32.xlu0 %v530, 28
      %v852 = vpop.permute.xlu0 %851
      %853 = vrot.lane.b32.xlu0 %v542, 28
      %v854 = vpop.permute.xlu0 %853
      %855 = vrot.lane.b32.xlu0 %v707, 28
      %v856 = vpop.permute.xlu0 %855
      %857 = vrot.lane.b32.xlu0 %v826, 28
      %v858 = vpop.permute.xlu0 %857
      %v859 = vrot.slane %v779, 1
      %v860 = vrot.slane %v814, 1
      %v861 = vsel %vm575, %v859, %v860
      %862 = vrot.lane.b32.xlu0 %v584, 32
      %v863 = vpop.permute.xlu0 %862
      %864 = vrot.lane.b32.xlu0 %v587, 32
      %v865 = vpop.permute.xlu0 %864
      %866 = vrot.lane.b32.xlu0 %v590, 32
      %v867 = vpop.permute.xlu0 %866
      %868 = vrot.lane.b32.xlu0 %v593, 32
      %v869 = vpop.permute.xlu0 %868
      %870 = vrot.lane.b32.xlu0 %v596, 32
      %v871 = vpop.permute.xlu0 %870
      %872 = vrot.lane.b32.xlu0 %v599, 32
      %v873 = vpop.permute.xlu0 %872
      %874 = vrot.lane.b32.xlu0 %v602, 32
      %v875 = vpop.permute.xlu0 %874
      %876 = vrot.lane.b32.xlu0 %v605, 32
      %v877 = vpop.permute.xlu0 %876
      %878 = vrot.lane.b32.xlu0 %v608, 32
      %v879 = vpop.permute.xlu0 %878
      %880 = vrot.lane.b32.xlu0 %v611, 32
      %v881 = vpop.permute.xlu0 %880
      %882 = vrot.lane.b32.xlu0 %v614, 32
      %v883 = vpop.permute.xlu0 %882
      %884 = vrot.lane.b32.xlu0 %v617, 32
      %v885 = vpop.permute.xlu0 %884
      %886 = vrot.lane.b32.xlu0 %v620, 32
      %v887 = vpop.permute.xlu0 %886
      %888 = vrot.lane.b32.xlu0 %v623, 32
      %v889 = vpop.permute.xlu0 %888
      %890 = vrot.lane.b32.xlu0 %v742, 32
      %v891 = vpop.permute.xlu0 %890
      %892 = vrot.lane.b32.xlu0 %v861, 32
      %v893 = vpop.permute.xlu0 %892
      %vm894 = vcmask 31744
      %v896 = vsel %vm894, %v286, %v544
      %v898 = vsel %vm894, %v287, %v546
      %v900 = vsel %vm894, %v288, %v548
      %v902 = vsel %vm894, %v289, %v550
      %v904 = vsel %vm894, %v290, %v552
      %v906 = vsel %vm894, %v291, %v554
      %v908 = vsel %vm894, %v292, %v556
      %v910 = vsel %vm894, %v293, %v558
      %v912 = vsel %vm894, %v294, %v560
      %v914 = vsel %vm894, %v295, %v562
      %v916 = vsel %vm894, %v296, %v564
      %v918 = vsel %vm894, %v297, %v566
      %v920 = vsel %vm894, %v298, %v568
      %v922 = vsel %vm894, %v299, %v570
      %v924 = vsel %vm894, %v300, %v572
      %v926 = vsel %vm894, %v301, %v574
      %vm927 = vcmask 64512
      %v929 = vsel %vm927, %v896, %v625
      %v931 = vsel %vm927, %v898, %v627
      %v933 = vsel %vm927, %v900, %v629
      %v935 = vsel %vm927, %v902, %v631
      %v937 = vsel %vm927, %v904, %v633
      %v939 = vsel %vm927, %v906, %v635
      %v941 = vsel %vm927, %v908, %v637
      %v943 = vsel %vm927, %v910, %v639
      %v945 = vsel %vm927, %v912, %v641
      %v947 = vsel %vm927, %v914, %v643
      %v949 = vsel %vm927, %v916, %v645
      %v951 = vsel %vm927, %v918, %v647
      %v953 = vsel %vm927, %v920, %v649
      %v955 = vsel %vm927, %v922, %v651
      %v957 = vsel %vm927, %v924, %v653
      %v959 = vsel %vm927, %v926, %v655
      %vm960 = vcmask 97280
      %v962 = vsel %vm960, %v929, %v662
      %v964 = vsel %vm960, %v931, %v664
      %v966 = vsel %vm960, %v933, %v666
      %v968 = vsel %vm960, %v935, %v668
      %v970 = vsel %vm960, %v937, %v670
      %v972 = vsel %vm960, %v939, %v672
      %v974 = vsel %vm960, %v941, %v674
      %v976 = vsel %vm960, %v943, %v676
      %v978 = vsel %vm960, %v945, %v678
      %v980 = vsel %vm960, %v947, %v680
      %v982 = vsel %vm960, %v949, %v682
      %v984 = vsel %vm960, %v951, %v684
      %v986 = vsel %vm960, %v953, %v686
      %v988 = vsel %vm960, %v955, %v688
      %v990 = vsel %vm960, %v957, %v690
      %v992 = vsel %vm960, %v959, %v692
      %vm993 = vcmask 130048
      %v995 = vsel %vm993, %v962, %v709
      %v997 = vsel %vm993, %v964, %v711
      %v999 = vsel %vm993, %v966, %v713
      %v1001 = vsel %vm993, %v968, %v715
      %v1003 = vsel %vm993, %v970, %v717
      %v1005 = vsel %vm993, %v972, %v719
      %v1007 = vsel %vm993, %v974, %v721
      %v1009 = vsel %vm993, %v976, %v723
      %v1011 = vsel %vm993, %v978, %v725
      %v1013 = vsel %vm993, %v980, %v727
      %v1015 = vsel %vm993, %v982, %v729
      %v1017 = vsel %vm993, %v984, %v731
      %v1019 = vsel %vm993, %v986, %v733
      %v1021 = vsel %vm993, %v988, %v735
      %v1023 = vsel %vm993, %v990, %v737
      %v1025 = vsel %vm993, %v992, %v739
      %vm1026 = vcmask 162816
      %v1028 = vsel %vm1026, %v995, %v744
      %v1030 = vsel %vm1026, %v997, %v746
      %v1032 = vsel %vm1026, %v999, %v748
      %v1034 = vsel %vm1026, %v1001, %v750
      %v1036 = vsel %vm1026, %v1003, %v752
      %v1038 = vsel %vm1026, %v1005, %v754
      %v1040 = vsel %vm1026, %v1007, %v756
      %v1042 = vsel %vm1026, %v1009, %v758
      %v1044 = vsel %vm1026, %v1011, %v760
      %v1046 = vsel %vm1026, %v1013, %v762
      %v1048 = vsel %vm1026, %v1015, %v764
      %v1050 = vsel %vm1026, %v1017, %v766
      %v1052 = vsel %vm1026, %v1019, %v768
      %v1054 = vsel %vm1026, %v1021, %v770
      %v1056 = vsel %vm1026, %v1023, %v772
      %v1058 = vsel %vm1026, %v1025, %v774
      %vm1059 = vcmask 195584
      %v1061 = vsel %vm1059, %v1028, %v781
      %v1063 = vsel %vm1059, %v1030, %v783
      %v1065 = vsel %vm1059, %v1032, %v785
      %v1067 = vsel %vm1059, %v1034, %v787
      %v1069 = vsel %vm1059, %v1036, %v789
      %v1071 = vsel %vm1059, %v1038, %v791
      %v1073 = vsel %vm1059, %v1040, %v793
      %v1075 = vsel %vm1059, %v1042, %v795
      %v1077 = vsel %vm1059, %v1044, %v797
      %v1079 = vsel %vm1059, %v1046, %v799
      %v1081 = vsel %vm1059, %v1048, %v801
      %v1083 = vsel %vm1059, %v1050, %v803
      %v1085 = vsel %vm1059, %v1052, %v805
      %v1087 = vsel %vm1059, %v1054, %v807
      %v1089 = vsel %vm1059, %v1056, %v809
      %v1091 = vsel %vm1059, %v1058, %v811
      %vm1092 = vcmask 228352
      %v1094 = vsel %vm1092, %v1061, %v828
      %v1096 = vsel %vm1092, %v1063, %v830
      %v1098 = vsel %vm1092, %v1065, %v832
      %v1100 = vsel %vm1092, %v1067, %v834
      %v1102 = vsel %vm1092, %v1069, %v836
      %v1104 = vsel %vm1092, %v1071, %v838
      %v1106 = vsel %vm1092, %v1073, %v840
      %v1108 = vsel %vm1092, %v1075, %v842
      %v1110 = vsel %vm1092, %v1077, %v844
      %v1112 = vsel %vm1092, %v1079, %v846
      %v1114 = vsel %vm1092, %v1081, %v848
      %v1116 = vsel %vm1092, %v1083, %v850
      %v1118 = vsel %vm1092, %v1085, %v852
      %v1120 = vsel %vm1092, %v1087, %v854
      %v1122 = vsel %vm1092, %v1089, %v856
      %v1124 = vsel %vm1092, %v1091, %v858
      %vm1125 = vcmask 261120
      %v1127 = vsel %vm1125, %v1094, %v863
      %v1129 = vsel %vm1125, %v1096, %v865
      %v1131 = vsel %vm1125, %v1098, %v867
      %v1133 = vsel %vm1125, %v1100, %v869
      %v1135 = vsel %vm1125, %v1102, %v871
      %v1137 = vsel %vm1125, %v1104, %v873
      %v1139 = vsel %vm1125, %v1106, %v875
      %v1141 = vsel %vm1125, %v1108, %v877
      %v1143 = vsel %vm1125, %v1110, %v879
      %v1145 = vsel %vm1125, %v1112, %v881
      %v1147 = vsel %vm1125, %v1114, %v883
      %v1149 = vsel %vm1125, %v1116, %v885
      %v1151 = vsel %vm1125, %v1118, %v887
      %v1153 = vsel %vm1125, %v1120, %v889
      %v1155 = vsel %vm1125, %v1122, %v891
      %v1157 = vsel %vm1125, %v1124, %v893
      %vm1158 = vcmask 293888
      %v1160 = vsel %vm1158, %v1127, 0
      %v1162 = vsel %vm1158, %v1129, 0
      %v1164 = vsel %vm1158, %v1131, 0
      %v1166 = vsel %vm1158, %v1133, 0
      %v1168 = vsel %vm1158, %v1135, 0
      %v1170 = vsel %vm1158, %v1137, 0
      %v1172 = vsel %vm1158, %v1139, 0
      %v1174 = vsel %vm1158, %v1141, 0
      %v1176 = vsel %vm1158, %v1143, 0
      %v1178 = vsel %vm1158, %v1145, 0
      %v1180 = vsel %vm1158, %v1147, 0
      %v1182 = vsel %vm1158, %v1149, 0
      %v1184 = vsel %vm1158, %v1151, 0
      %v1186 = vsel %vm1158, %v1153, 0
      %v1188 = vsel %vm1158, %v1155, 0
      %v1190 = vsel %vm1158, %v1157, 0
      %v1192 = vld [vmem:[%s1] sm:$0xf]
      %v1193 = vld [vmem:[%s1 + $0x4] sm:$0xf]
      %v1194 = vld [vmem:[%s1 + $0x8] sm:$0xf]
      %v1195 = vld [vmem:[%s1 + $0xc] sm:$0xf]
      %v1196 = vld [vmem:[%s1 + $0x10] sm:$0xf]
      %v1197 = vld [vmem:[%s1 + $0x14] sm:$0xf]
      %v1198 = vld [vmem:[%s1 + $0x18] sm:$0xf]
      %v1199 = vld [vmem:[%s1 + $0x1c] sm:$0xf]
      %v1200 = vld [vmem:[%s1 + $0x20] sm:$0xf]
      %v1201 = vld [vmem:[%s1 + $0x24] sm:$0xf]
      %v1202 = vld [vmem:[%s1 + $0x28] sm:$0xf]
      %v1203 = vld [vmem:[%s1 + $0x2c] sm:$0xf]
      %v1204 = vld [vmem:[%s1 + $0x30] sm:$0xf]
      %v1205 = vld [vmem:[%s1 + $0x34] sm:$0xf]
      %v1206 = vld [vmem:[%s1 + $0x38] sm:$0xf]
      %v1207 = vld [vmem:[%s1 + $0x3c] sm:$0xf]
      %v1208 = vld [vmem:[%s2] sm:$0x1]
      %v1210 = vlaneseq
      %v1211 = vshrl.u32 %v1210, 7
      %v1212 = vsub.s32 0, %v1211
      %v1213 = vrot.slane %v1208, %v1212
      %v1231 = vunpack.c.l.b16 %v1192
      %v1232 = vunpack.c.l.b16 %v1193
      %v1233 = vunpack.c.l.b16 %v1194
      %v1234 = vunpack.c.l.b16 %v1195
      %v1235 = vunpack.c.l.b16 %v1196
      %v1236 = vunpack.c.l.b16 %v1197
      %v1237 = vunpack.c.l.b16 %v1198
      %v1238 = vunpack.c.l.b16 %v1199
      %v1239 = vunpack.c.l.b16 %v1200
      %v1240 = vunpack.c.l.b16 %v1201
      %v1241 = vunpack.c.l.b16 %v1202
      %v1242 = vunpack.c.l.b16 %v1203
      %v1243 = vunpack.c.l.b16 %v1204
      %v1244 = vunpack.c.l.b16 %v1205
      %v1245 = vunpack.c.l.b16 %v1206
      %v1246 = vunpack.c.l.b16 %v1207
      %v1247 = vpack.c.b16 %v1232, %v1231
      %v1248 = vpack.c.b16 %v1234, %v1233
      %v1249 = vpack.c.b16 %v1236, %v1235
      %v1250 = vpack.c.b16 %v1238, %v1237
      %v1251 = vpack.c.b16 %v1240, %v1239
      %v1252 = vpack.c.b16 %v1242, %v1241
      %v1253 = vpack.c.b16 %v1244, %v1243
      %v1254 = vpack.c.b16 %v1246, %v1245
      %1263 = vmatprep.subr.bf16.mxu0 0
      %1264 = vmatpush1.bf16.msra.mxu0 %v1254
      %1265 = vmatprep.subr.bf16.mxu0 0
      %1266 = vmatpush1.bf16.msra.mxu0 %v1253
      %1267 = vmatprep.subr.bf16.mxu0 0
      %1268 = vmatpush1.bf16.msra.mxu0 %v1252
      %1269 = vmatprep.subr.bf16.mxu0 0
      %1270 = vmatpush1.bf16.msra.mxu0 %v1251
      %1271 = vmatprep.subr.bf16.mxu0 0
      %1272 = vmatpush1.bf16.msra.mxu0 %v1250
      %1273 = vmatprep.subr.bf16.mxu0 0
      %1274 = vmatpush1.bf16.msra.mxu0 %v1249
      %1275 = vmatprep.subr.bf16.mxu0 0
      %1276 = vmatpush1.bf16.msra.mxu0 %v1248
      %1277 = vmatprep.subr.bf16.mxu0 0
      %1278 = vmatpush1.bf16.msra.mxu0 %v1247
      %1279 = vmatprep.subr.bf16.mxu0 0
      %1280 = vmatpush2.bf16.msra.mxu0 0
      %1281 = vmatprep.subr.bf16.mxu0 0
      %1282 = vmatpush2.bf16.msra.mxu0 0
      %1283 = vmatprep.subr.bf16.mxu0 0
      %1284 = vmatpush2.bf16.msra.mxu0 0
      %1285 = vmatprep.subr.bf16.mxu0 0
      %1286 = vmatpush2.bf16.msra.mxu0 0
      %1287 = vmatprep.subr.bf16.mxu0 0
      %1288 = vmatpush2.bf16.msra.mxu0 0
      %1289 = vmatprep.subr.bf16.mxu0 0
      %1290 = vmatpush2.bf16.msra.mxu0 0
      %1291 = vmatprep.subr.bf16.mxu0 0
      %1292 = vmatpush2.bf16.msra.mxu0 0
      %1293 = vmatprep.subr.bf16.mxu0 0
      %1294 = vmatpush2.bf16.msra.mxu0 0
      %1295 = vmatprep.mubr.bf16.mxu0 0
      %1296 = vmatmul.mubr.bf16.gmra.mxu0 %v1160
      %v1297 = vpop.f32.mrf.mxu0
      %v1298 = vadd.f32 %v1213, %v1297
      %v1299 = vpop.f32.mrf.mxu0
      %v1300 = vpop.f32.mrf.mxu0
      %v1301 = vadd.f32 %v1213, %v1300
      %v1302 = vpop.f32.mrf.mxu0
      %1303 = vmatprep.mubr.bf16.mxu0 0
      %1304 = vmatmul.mubr.bf16.gmra.mxu0 %v1162
      %v1305 = vpop.f32.mrf.mxu0
      %v1306 = vadd.f32 %v1213, %v1305
      %v1307 = vpop.f32.mrf.mxu0
      %v1308 = vpop.f32.mrf.mxu0
      %v1309 = vadd.f32 %v1213, %v1308
      %v1310 = vpop.f32.mrf.mxu0
      %1311 = vmatprep.mubr.bf16.mxu0 0
      %1312 = vmatmul.mubr.bf16.gmra.mxu0 %v1164
      %v1313 = vpop.f32.mrf.mxu0
      %v1314 = vadd.f32 %v1213, %v1313
      %v1315 = vpop.f32.mrf.mxu0
      %v1316 = vpop.f32.mrf.mxu0
      %v1317 = vadd.f32 %v1213, %v1316
      %v1318 = vpop.f32.mrf.mxu0
      %1319 = vmatprep.mubr.bf16.mxu0 0
      %1320 = vmatmul.mubr.bf16.gmra.mxu0 %v1166
      %v1321 = vpop.f32.mrf.mxu0
      %v1322 = vadd.f32 %v1213, %v1321
      %v1323 = vpop.f32.mrf.mxu0
      %v1324 = vpop.f32.mrf.mxu0
      %v1325 = vadd.f32 %v1213, %v1324
      %v1326 = vpop.f32.mrf.mxu0
      %1327 = vmatprep.mubr.bf16.mxu0 0
      %1328 = vmatmul.mubr.bf16.gmra.mxu0 %v1168
      %v1329 = vpop.f32.mrf.mxu0
      %v1330 = vadd.f32 %v1213, %v1329
      %v1331 = vpop.f32.mrf.mxu0
      %v1332 = vpop.f32.mrf.mxu0
      %v1333 = vadd.f32 %v1213, %v1332
      %v1334 = vpop.f32.mrf.mxu0
      %1335 = vmatprep.mubr.bf16.mxu0 0
      %1336 = vmatmul.mubr.bf16.gmra.mxu0 %v1170
      %v1337 = vpop.f32.mrf.mxu0
      %v1338 = vadd.f32 %v1213, %v1337
      %v1339 = vpop.f32.mrf.mxu0
      %v1340 = vpop.f32.mrf.mxu0
      %v1341 = vadd.f32 %v1213, %v1340
      %v1342 = vpop.f32.mrf.mxu0
      %1343 = vmatprep.mubr.bf16.mxu0 0
      %1344 = vmatmul.mubr.bf16.gmra.mxu0 %v1172
      %v1345 = vpop.f32.mrf.mxu0
      %v1346 = vadd.f32 %v1213, %v1345
      %v1347 = vpop.f32.mrf.mxu0
      %v1348 = vpop.f32.mrf.mxu0
      %v1349 = vadd.f32 %v1213, %v1348
      %v1350 = vpop.f32.mrf.mxu0
      %1351 = vmatprep.mubr.bf16.mxu0 0
      %1352 = vmatmul.mubr.bf16.gmra.mxu0 %v1174
      %v1353 = vpop.f32.mrf.mxu0
      %v1354 = vadd.f32 %v1213, %v1353
      %v1355 = vpop.f32.mrf.mxu0
      %v1356 = vpop.f32.mrf.mxu0
      %v1357 = vadd.f32 %v1213, %v1356
      %v1358 = vpop.f32.mrf.mxu0
      %1359 = vmatprep.mubr.bf16.mxu0 0
      %1360 = vmatmul.mubr.bf16.gmra.mxu0 %v1176
      %v1361 = vpop.f32.mrf.mxu0
      %v1362 = vadd.f32 %v1213, %v1361
      %v1363 = vpop.f32.mrf.mxu0
      %v1364 = vpop.f32.mrf.mxu0
      %v1365 = vadd.f32 %v1213, %v1364
      %v1366 = vpop.f32.mrf.mxu0
      %1367 = vmatprep.mubr.bf16.mxu0 0
      %1368 = vmatmul.mubr.bf16.gmra.mxu0 %v1178
      %v1369 = vpop.f32.mrf.mxu0
      %v1370 = vadd.f32 %v1213, %v1369
      %v1371 = vpop.f32.mrf.mxu0
      %v1372 = vpop.f32.mrf.mxu0
      %v1373 = vadd.f32 %v1213, %v1372
      %v1374 = vpop.f32.mrf.mxu0
      %1375 = vmatprep.mubr.bf16.mxu0 0
      %1376 = vmatmul.mubr.bf16.gmra.mxu0 %v1180
      %v1377 = vpop.f32.mrf.mxu0
      %v1378 = vadd.f32 %v1213, %v1377
      %v1379 = vpop.f32.mrf.mxu0
      %v1380 = vpop.f32.mrf.mxu0
      %v1381 = vadd.f32 %v1213, %v1380
      %v1382 = vpop.f32.mrf.mxu0
      %1383 = vmatprep.mubr.bf16.mxu0 0
      %1384 = vmatmul.mubr.bf16.gmra.mxu0 %v1182
      %v1385 = vpop.f32.mrf.mxu0
      %v1386 = vadd.f32 %v1213, %v1385
      %v1387 = vpop.f32.mrf.mxu0
      %v1388 = vpop.f32.mrf.mxu0
      %v1389 = vadd.f32 %v1213, %v1388
      %v1390 = vpop.f32.mrf.mxu0
      %1391 = vmatprep.mubr.bf16.mxu0 0
      %1392 = vmatmul.mubr.bf16.gmra.mxu0 %v1184
      %v1393 = vpop.f32.mrf.mxu0
      %v1394 = vadd.f32 %v1213, %v1393
      %v1395 = vpop.f32.mrf.mxu0
      %v1396 = vpop.f32.mrf.mxu0
      %v1397 = vadd.f32 %v1213, %v1396
      %v1398 = vpop.f32.mrf.mxu0
      %1399 = vmatprep.mubr.bf16.mxu0 0
      %1400 = vmatmul.mubr.bf16.gmra.mxu0 %v1186
      %v1401 = vpop.f32.mrf.mxu0
      %v1402 = vadd.f32 %v1213, %v1401
      %v1403 = vpop.f32.mrf.mxu0
      %v1404 = vpop.f32.mrf.mxu0
      %v1405 = vadd.f32 %v1213, %v1404
      %v1406 = vpop.f32.mrf.mxu0
      %1407 = vmatprep.mubr.bf16.mxu0 0
      %1408 = vmatmul.mubr.bf16.gmra.mxu0 %v1188
      %v1409 = vpop.f32.mrf.mxu0
      %v1410 = vadd.f32 %v1213, %v1409
      %v1411 = vpop.f32.mrf.mxu0
      %v1412 = vpop.f32.mrf.mxu0
      %v1413 = vadd.f32 %v1213, %v1412
      %v1414 = vpop.f32.mrf.mxu0
      %1415 = vmatprep.mubr.bf16.mxu0 0
      %1416 = vmatmul.mubr.bf16.gmra.mxu0 %v1190
      %v1417 = vpop.f32.mrf.mxu0
      %v1418 = vadd.f32 %v1213, %v1417
      %v1419 = vpop.f32.mrf.mxu0
      %v1420 = vpop.f32.mrf.mxu0
      %v1421 = vadd.f32 %v1213, %v1420
      %v1422 = vpop.f32.mrf.mxu0
      %1423 = vdwg.mxu0
      %v1424 = vmax.f32 %v1298, 0.0
      %v1425 = vmax.f32 %v1301, 0.0
      %v1426 = vmax.f32 %v1306, 0.0
      %v1427 = vmax.f32 %v1309, 0.0
      %v1428 = vmax.f32 %v1314, 0.0
      %v1429 = vmax.f32 %v1317, 0.0
      %v1430 = vmax.f32 %v1322, 0.0
      %v1431 = vmax.f32 %v1325, 0.0
      %v1432 = vmax.f32 %v1330, 0.0
      %v1433 = vmax.f32 %v1333, 0.0
      %v1434 = vmax.f32 %v1338, 0.0
      %v1435 = vmax.f32 %v1341, 0.0
      %v1436 = vmax.f32 %v1346, 0.0
      %v1437 = vmax.f32 %v1349, 0.0
      %v1438 = vmax.f32 %v1354, 0.0
      %v1439 = vmax.f32 %v1357, 0.0
      %v1440 = vmax.f32 %v1362, 0.0
      %v1441 = vmax.f32 %v1365, 0.0
      %v1442 = vmax.f32 %v1370, 0.0
      %v1443 = vmax.f32 %v1373, 0.0
      %v1444 = vmax.f32 %v1378, 0.0
      %v1445 = vmax.f32 %v1381, 0.0
      %v1446 = vmax.f32 %v1386, 0.0
      %v1447 = vmax.f32 %v1389, 0.0
      %v1448 = vmax.f32 %v1394, 0.0
      %v1449 = vmax.f32 %v1397, 0.0
      %v1450 = vmax.f32 %v1402, 0.0
      %v1451 = vmax.f32 %v1405, 0.0
      %v1452 = vmax.f32 %v1410, 0.0
      %v1453 = vmax.f32 %v1413, 0.0
      %v1454 = vmax.f32 %v1418, 0.0
      %v1455 = vmax.f32 %v1421, 0.0
      %v1456 = vadd.f32 %v1424, %v1425
      %v1457 = vadd.f32 %v1456, %v1426
      %v1458 = vadd.f32 %v1457, %v1427
      %v1459 = vadd.f32 %v1458, %v1428
      %v1460 = vadd.f32 %v1459, %v1429
      %v1461 = vadd.f32 %v1460, %v1430
      %v1462 = vadd.f32 %v1461, %v1431
      %v1463 = vadd.f32 %v1462, %v1432
      %v1464 = vadd.f32 %v1463, %v1433
      %v1465 = vadd.f32 %v1464, %v1434
      %v1466 = vadd.f32 %v1465, %v1435
      %v1467 = vadd.f32 %v1466, %v1436
      %v1468 = vadd.f32 %v1467, %v1437
      %v1469 = vadd.f32 %v1468, %v1438
      %v1470 = vadd.f32 %v1469, %v1439
      %v1471 = vadd.f32 %v1470, %v1440
      %v1472 = vadd.f32 %v1471, %v1441
      %v1473 = vadd.f32 %v1472, %v1442
      %v1474 = vadd.f32 %v1473, %v1443
      %v1475 = vadd.f32 %v1474, %v1444
      %v1476 = vadd.f32 %v1475, %v1445
      %v1477 = vadd.f32 %v1476, %v1446
      %v1478 = vadd.f32 %v1477, %v1447
      %v1479 = vadd.f32 %v1478, %v1448
      %v1480 = vadd.f32 %v1479, %v1449
      %v1481 = vadd.f32 %v1480, %v1450
      %v1482 = vadd.f32 %v1481, %v1451
      %v1483 = vadd.f32 %v1482, %v1452
      %v1484 = vadd.f32 %v1483, %v1453
      %v1485 = vadd.f32 %v1484, %v1454
      %v1486 = vadd.f32 %v1485, %v1455
      %v1487 = vrot.slane %v1486, 4
      %v1488 = vadd.f32 %v1486, %v1487
      %v1489 = vrot.slane %v1488, 2
      %v1490 = vadd.f32 %v1488, %v1489
      %v1491 = vrot.slane %v1490, 1
      %v1492 = vadd.f32 %v1490, %v1491
      %v1493 = vmul.f32 %v1492, 0.00390625
      %1494 = vst [vmem:[%s166] sm:$0x1] %v1493
      %p1495 = scmp.lt.s32.totalorder %s14, 1
      %s1496 = scalar_select %p1495, %s14, 1
      %s1497 = scalar_lea.vmem %s3, %s1496
      // Predicated region
      $region33: #{base_model_forward.2} parent=31 // pred_check
        %p1498 = pneg %p100
      $region34: #{base_model_forward.2} parent=31 // pred_check_branch
        %1500 = sbr.rel (%p1498) target = $region36
      $region35: #{base_model_forward.2} parent=31 // pred_region
        _
      $region36: #{base_model_forward.2} parent=31 // pred_fallthru
        _
    $region32: #{base_model_forward.2} parent=5 // pred_fallthru
      _
    %p1501 = scmp.le.s32.totalorder 2, %s9
    // Predicated region
    $region37: #{base_model_forward.2} parent=5 // pred_check
      %p1502 = pneg %p1501
    $region38: #{base_model_forward.2} parent=5 // pred_check_branch
      %1504 = sbr.rel (%p1502) target = $region40
    $region39: #{base_model_forward.2} parent=5 // pred_region
      %s1505 = ssub.s32 %s9, 2
      // Predicated region
      $region41: #{base_model_forward.2} parent=39 // pred_check
        %p1506 = pneg %p106
      $region42: #{base_model_forward.2} parent=39 // pred_check_branch
        %1508 = sbr.rel (%p1506) target = $region44
      $region43: #{base_model_forward.2} parent=39 // pred_region
        %p1509 = scmp.lt.s32.totalorder %s15, 1
        %s1510 = scalar_select %p1509, %s15, 1
        %s1511 = scalar_lea.vmem %s3, %s1510
      $region44: #{base_model_forward.2} parent=39 // pred_fallthru
        _
    $region40: #{base_model_forward.2} parent=5 // pred_fallthru
      _
  $region6: #{base_model_forward.2} parent=0 // loop_footer
    %s13 = sadd.s32 1, %s9
  $region7: #{base_model_forward.2} parent=0 // loop_footer_branch
    %8 = sbr.rel target = $region3
  $region8: #{base_model_forward.2} parent=0 // loop_exit
    _

</llo_original>
